<compile_context>
chip_gen: v5e
topology: v5e:2x2
jax: 0.10.0
libtpu: 0.0.40
codegen_flags: <defaults>
</compile_context>

<pallas_src>
import functools

import jax
import jax.numpy as jnp
import numpy as np
from jax import lax
from jax.experimental import pallas as pl
from jax.experimental.pallas import tpu as pltpu


# ----------------------------------------------------------------------------
# Kernel
# ----------------------------------------------------------------------------
def _encoder_layer_kernel(
    x_ref, npm_ref, msk_ref,
    wq_ref, bq_ref, wk_ref, bk_ref, wv_ref, bv_ref,
    wfc_ref, bfc_ref, ln1g_ref, ln1b_ref,
    w1_ref, b1_ref, w2_ref, b2_ref, ln2g_ref, ln2b_ref,
    out_ref, attn_ref,
    k_scr, v_scr,                              # persistent VMEM scratch (per batch K/V)
    *, n_head, d_k, d_v, tq):
    f32 = jnp.float32
    bf16 = jnp.bfloat16
    qt = pl.program_id(1)

    # --- Full-sequence K/V projections: once per batch (first q-tile step of the
    # 'arbitrary' axis) into persistent VMEM scratch, reused by all q-tiles. ---
    @pl.when(qt == 0)
    def _():
        xb_full = x_ref[0].astype(bf16)                        # (L, D)
        k_scr[...] = (jnp.dot(xb_full, wk_ref[...], preferred_element_type=f32)
                      + bk_ref[...]).astype(bf16)
        v_scr[...] = (jnp.dot(xb_full, wv_ref[...], preferred_element_type=f32)
                      + bv_ref[...]).astype(bf16)

    # --- Current query tile (f32 for residual/LayerNorm; bf16 only on MXU operands). ---
    q0 = pl.multiple_of(qt * tq, tq)
    x_tile = x_ref[0, pl.ds(q0, tq), :]                        # (TQ, D) f32
    xb = x_tile.astype(bf16)
    npm = npm_ref[0]                                           # (TQ, 1) f32
    msk = msk_ref[0]                                           # (TQ, L) int8, 1 => masked key

    # Q projection (1/sqrt(d_k) already folded into wq/bq host-side).
    q = (jnp.dot(xb, wq_ref[...], preferred_element_type=f32)
         + bq_ref[...]).astype(bf16)                           # (TQ, n_head*d_k)

    o_heads = []
    for h in range(n_head):
        q_h = q[:, h * d_k:(h + 1) * d_k]
        k_h = k_scr[:, h * d_k:(h + 1) * d_k]
        v_h = v_scr[:, h * d_v:(h + 1) * d_v]

        # scores = q_h @ k_h^T  (contraction on last dims, f32 accumulation)
        s = lax.dot_general(q_h, k_h, (((1,), (1,)), ((), ())),
                            preferred_element_type=f32)        # (TQ, L)
        # Mask applied straight from the int8 ref — no (TQ,L) f32 temporary held live.
        # Large finite negative => no NaN even for fully-masked query rows.
        s = jnp.where(msk != 0, jnp.float32(-1e30), s)

        m = jnp.max(s, axis=-1, keepdims=True)
        e = jnp.exp(s - m)
        p = e / jnp.sum(e, axis=-1, keepdims=True)             # exact softmax (rows sum to 1)

        attn_ref[h, 0] = p.astype(attn_ref.dtype)              # bf16, head-major writeback
        o_heads.append(
            jnp.dot(p.astype(bf16), v_h, preferred_element_type=f32).astype(bf16))

    # Lane-dense concat feeding one full-K output projection (no narrow scratch stores).
    o_cat = jnp.concatenate(o_heads, axis=-1)                  # (TQ, n_head*d_v) bf16
    attn_out = jnp.dot(o_cat, wfc_ref[...], preferred_element_type=f32) + bfc_ref[...]

    # Residual + LayerNorm (attention sub-layer), f32 math.
    y = attn_out + x_tile
    mu = jnp.mean(y, axis=-1, keepdims=True)
    var = jnp.mean((y - mu) ** 2, axis=-1, keepdims=True)
    y = (y - mu) * lax.rsqrt(var + 1e-5) * ln1g_ref[...] + ln1b_ref[...]
    y = y * npm                                                # enc_output *= non_pad_mask

    # Position-wise FFN: Conv1d(k=1) -> ReLU -> Conv1d(k=1) == two matmuls, tiled over TQ.
    h1 = jnp.maximum(
        jnp.dot(y.astype(bf16), w1_ref[...], preferred_element_type=f32) + b1_ref[...],
        0.0)
    f = jnp.dot(h1.astype(bf16), w2_ref[...], preferred_element_type=f32) + b2_ref[...]

    # Residual + LayerNorm (FFN sub-layer), f32 math.
    z = f + y
    mu2 = jnp.mean(z, axis=-1, keepdims=True)
    var2 = jnp.mean((z - mu2) ** 2, axis=-1, keepdims=True)
    z = (z - mu2) * lax.rsqrt(var2 + 1e-5) * ln2g_ref[...] + ln2b_ref[...]
    z = z * npm                                                # enc_output *= non_pad_mask

    out_ref[0] = z


# ----------------------------------------------------------------------------
# Wrapper
# ----------------------------------------------------------------------------
def _pick_q_tile(L, target=256):
    """Largest multiple of 8 that divides L and is <= target (fallback: full L)."""
    if L <= target:
        return L
    t = (target // 8) * 8
    while t >= 8:
        if L % t == 0:
            return t
        t -= 8
    return L


def _weight_spec(shape):
    """Replicated (constant-index) weight BlockSpec; single-buffered to save VMEM."""
    n = len(shape)
    imap = lambda b, qt, _n=n: (0,) * _n
    try:
        return pl.BlockSpec(shape, imap, pipeline_mode=pl.Buffered(1))
    except TypeError:  # older API without pipeline_mode
        return pl.BlockSpec(shape, imap)


def video_encoder_layer(x, non_pad_mask, slf_attn_mask, params, *,
                        n_head, d_k, d_v, q_tile=256):
    B, L, D = x.shape
    f32 = jnp.float32
    bf16 = jnp.bfloat16
    temperature = float(np.sqrt(d_k))
    d_inner = int(params["w1"].shape[1])

    TQ = _pick_q_tile(L, q_tile)
    n_qt = L // TQ

    # Fold softmax temperature into the query projection; matmul weights in bf16
    # (MXU-native); biases / LayerNorm params in f32.
    weights = [
        (params["wq"] / temperature).astype(bf16),
        (params["bq"] / temperature).astype(f32),
        params["wk"].astype(bf16), params["bk"].astype(f32),
        params["wv"].astype(bf16), params["bv"].astype(f32),
        params["wfc"].astype(bf16), params["bfc"].astype(f32),
        params["ln1_g"].astype(f32), params["ln1_b"].astype(f32),
        params["w1"].astype(bf16), params["b1"].astype(f32),
        params["w2"].astype(bf16), params["b2"].astype(f32),
        params["ln2_g"].astype(f32), params["ln2_b"].astype(f32),
    ]

    x_f32 = x.astype(f32)                               # f32 residual fidelity
    npm = non_pad_mask.astype(f32)
    msk_i8 = (slf_attn_mask > 0.5).astype(jnp.int8)     # 4x less mask HBM/VMEM traffic

    in_specs = [
        # x: full (L, D) per batch, resident across the q-tile axis (only re-DMA'd
        # when the batch index changes); queried tiles are sliced in VMEM.
        pl.BlockSpec((1, L, D), lambda b, qt: (b, 0, 0)),
        pl.BlockSpec((1, TQ, 1), lambda b, qt: (b, qt, 0)),    # non_pad_mask tile (f32)
        pl.BlockSpec((1, TQ, L), lambda b, qt: (b, qt, 0)),    # attn mask tile (int8)
    ] + [_weight_spec(w.shape) for w in weights]

    out_specs = [
        pl.BlockSpec((1, TQ, D), lambda b, qt: (b, qt, 0)),
        pl.BlockSpec((n_head, 1, TQ, L), lambda b, qt: (0, b, qt, 0)),  # head-major attn
    ]
    out_shape = [
        jax.ShapeDtypeStruct((B, L, D), f32),
        jax.ShapeDtypeStruct((n_head, B, L, L), bf16),  # bf16 halves attn writeback traffic
    ]

    # Advisory cost estimate for XLA's scheduler.
    flops = B * (
        2 * L * D * (n_head * (2 * d_k + d_v))          # q, k, v projections
        + 2 * n_head * L * L * (d_k + d_v)              # qk^T and p@v
        + 2 * L * (n_head * d_v) * D                    # output projection
        + 2 * L * D * d_inner + 2 * L * d_inner * D     # FFN
    )
    transcendentals = B * n_head * L * L
    weight_bytes = sum(int(np.prod(w.shape)) * int(w.dtype.itemsize) for w in weights)
    bytes_accessed = (
        B * L * D * 4 + B * L * 4 + B * L * L * 1 + weight_bytes
        + B * L * D * 4 + n_head * B * L * L * 2
    )
    cost = pl.CostEstimate(flops=int(flops),
                           transcendentals=int(transcendentals),
                           bytes_accessed=int(bytes_accessed))

    kernel = functools.partial(_encoder_layer_kernel,
                               n_head=n_head, d_k=d_k, d_v=d_v, tq=TQ)

    enc_out, attn_hb = pl.pallas_call(
        kernel,
        grid=(B, n_qt),
        in_specs=in_specs,
        out_specs=out_specs,
        out_shape=out_shape,
        scratch_shapes=[
            pltpu.VMEM((L, n_head * d_k), bf16),        # persistent per-batch K
            pltpu.VMEM((L, n_head * d_v), bf16),        # persistent per-batch V
        ],
        compiler_params=pltpu.CompilerParams(
            # q-tile axis must be 'arbitrary': K/V scratch is filled at qt==0 and
            # reused by later q-tiles of the same batch.
            dimension_semantics=("parallel", "arbitrary"),
            # Explicit scoped-VMEM limit: above the 16/32 MiB defaults, under the
            # ~56 MiB headroom guidance for v7x (64 MiB physical per TC).
            vmem_limit_bytes=48 * 1024 * 1024,
        ),
        cost_estimate=cost,
    )(x_f32, npm, msk_i8, *weights)

    # Head-major kernel layout -> PyTorch's (n_head*B, L, L) is a free reshape.
    attn = attn_hb.reshape(n_head * B, L, L)
    return enc_out, attn


# ----------------------------------------------------------------------------
# Deterministic parameter init (shapes follow the PyTorch module)
# ----------------------------------------------------------------------------
def init_params(key, d_model, d_inner, n_head, d_k, d_v):
    ks = jax.random.split(key, 12)
    nrm = lambda k, shape, std: jax.random.normal(k, shape, jnp.float32) * std
    p = {}
    # Linear projections stored already transposed: (in_features, out_features)
    p["wq"] = nrm(ks[0], (d_model, n_head * d_k), np.sqrt(2.0 / (d_model + d_k)))
    p["wk"] = nrm(ks[1], (d_model, n_head * d_k), np.sqrt(2.0 / (d_model + d_k)))
    p["wv"] = nrm(ks[2], (d_model, n_head * d_v), np.sqrt(2.0 / (d_model + d_v)))
    p["bq"] = nrm(ks[3], (1, n_head * d_k), 0.02)
    p["bk"] = nrm(ks[4], (1, n_head * d_k), 0.02)
    p["bv"] = nrm(ks[5], (1, n_head * d_v), 0.02)
    p["wfc"] = nrm(ks[6], (n_head * d_v, d_model), np.sqrt(2.0 / (n_head * d_v + d_model)))
    p["bfc"] = nrm(ks[7], (1, d_model), 0.02)
    p["ln1_g"] = jnp.ones((1, d_model), jnp.float32)
    p["ln1_b"] = jnp.zeros((1, d_model), jnp.float32)
    # Conv1d(k=1) weights (out, in, 1) stored as transposed matmul weights (in, out)
    p["w1"] = nrm(ks[8], (d_model, d_inner), np.sqrt(2.0 / d_model))
    p["b1"] = nrm(ks[9], (1, d_inner), 0.02)
    p["w2"] = nrm(ks[10], (d_inner, d_model), np.sqrt(2.0 / d_inner))
    p["b2"] = nrm(ks[11], (1, d_model), 0.02)
    p["ln2_g"] = jnp.ones((1, d_model), jnp.float32)
    p["ln2_b"] = jnp.zeros((1, d_model), jnp.float32)
    return p


# ----------------------------------------------------------------------------
# Plain-JAX f32 reference (same math) for a correctness check
# ----------------------------------------------------------------------------
def reference_layer(x, non_pad_mask, slf_attn_mask, p, *, n_head, d_k, d_v):
    hp = jax.lax.Precision.HIGHEST
    B, L, D = x.shape

    def layer_norm(t, g, b):
        mu = jnp.mean(t, axis=-1, keepdims=True)
        var = jnp.mean((t - mu) ** 2, axis=-1, keepdims=True)
        return (t - mu) * jax.lax.rsqrt(var + 1e-5) * g + b

    def one(xb, npmb, mskb):
        q = jnp.matmul(xb, p["wq"], precision=hp) + p["bq"][0]
        k = jnp.matmul(xb, p["wk"], precision=hp) + p["bk"][0]
        v = jnp.matmul(xb, p["wv"], precision=hp) + p["bv"][0]
        q = q.reshape(L, n_head, d_k).transpose(1, 0, 2)
        k = k.reshape(L, n_head, d_k).transpose(1, 0, 2)
        v = v.reshape(L, n_head, d_v).transpose(1, 0, 2)
        s = jnp.einsum("hqd,hkd->hqk", q, k, precision=hp) / np.sqrt(d_k)
        s = jnp.where(mskb[None] > 0.5, -1e30, s)   # finite neg, matches kernel
        attn = jax.nn.softmax(s, axis=-1)
        o = jnp.einsum("hqk,hkd->hqd", attn, v, precision=hp)
        o = o.transpose(1, 0, 2).reshape(L, n_head * d_v)
        o = jnp.matmul(o, p["wfc"], precision=hp) + p["bfc"][0]
        y = layer_norm(o + xb, p["ln1_g"][0], p["ln1_b"][0]) * npmb
        h1 = jax.nn.relu(jnp.matmul(y, p["w1"], precision=hp) + p["b1"][0])
        f = jnp.matmul(h1, p["w2"], precision=hp) + p["b2"][0]
        z = layer_norm(f + y, p["ln2_g"][0], p["ln2_b"][0]) * npmb
        return z, attn

    z, attn = jax.vmap(one)(x, non_pad_mask, slf_attn_mask)
    attn = jnp.transpose(attn, (1, 0, 2, 3)).reshape(n_head * B, L, L)
    return z, attn


# ----------------------------------------------------------------------------
if __name__ == "__main__":
    B, L = 2, 8
    d_model, d_inner, n_head, d_k, d_v = 32, 64, 2, 16, 16

    key = jax.random.PRNGKey(0)
    k_x, k_p = jax.random.split(key)

    x = jax.random.normal(k_x, (B, L, d_model), jnp.float32)

    # Padding setup: sequence 0 full length, sequence 1 has 2 pad positions.
    lengths = jnp.array([L, L - 2], dtype=jnp.int32)
    pos = jnp.arange(L)
    non_pad = (pos[None, :] < lengths[:, None]).astype(jnp.float32)           # (B, L)
    non_pad_mask = non_pad[..., None]                                          # (B, L, 1)
    slf_attn_mask = jnp.broadcast_to((1.0 - non_pad)[:, None, :], (B, L, L))   # (B, L, L)

    params = init_params(k_p, d_model, d_inner, n_head, d_k, d_v)

    enc_out, attn = video_encoder_layer(
        x, non_pad_mask, slf_attn_mask, params, n_head=n_head, d_k=d_k, d_v=d_v)
    jax.block_until_ready(enc_out)
    jax.block_until_ready(attn)

    ref_out, ref_attn = reference_layer(
        x, non_pad_mask, slf_attn_mask, params, n_head=n_head, d_k=d_k, d_v=d_v)
    # bf16 matmul path (and bf16 attn writeback) vs f32-HIGHEST reference.
    np.testing.assert_allclose(np.asarray(enc_out), np.asarray(ref_out),
                               rtol=5e-2, atol=5e-2)
    np.testing.assert_allclose(np.asarray(attn.astype(jnp.float32)),
                               np.asarray(ref_attn), rtol=5e-2, atol=5e-2)

    print("KERNEL_OK")
</pallas_src>

<mosaic_0001>
module attributes {stable_mosaic.version = 11 : i64} {
  func.func @_encoder_layer_kernel(%arg0: i32, %arg1: i32, %arg2: memref<1x8x32xf32, #tpu.memory_space<vmem>>, %arg3: memref<1x8x1xf32, #tpu.memory_space<vmem>>, %arg4: memref<1x8x8xi8, #tpu.memory_space<vmem>>, %arg5: memref<32x32xbf16, #tpu.memory_space<vmem>>, %arg6: memref<1x32xf32, #tpu.memory_space<vmem>>, %arg7: memref<32x32xbf16, #tpu.memory_space<vmem>>, %arg8: memref<1x32xf32, #tpu.memory_space<vmem>>, %arg9: memref<32x32xbf16, #tpu.memory_space<vmem>>, %arg10: memref<1x32xf32, #tpu.memory_space<vmem>>, %arg11: memref<32x32xbf16, #tpu.memory_space<vmem>>, %arg12: memref<1x32xf32, #tpu.memory_space<vmem>>, %arg13: memref<1x32xf32, #tpu.memory_space<vmem>>, %arg14: memref<1x32xf32, #tpu.memory_space<vmem>>, %arg15: memref<32x64xbf16, #tpu.memory_space<vmem>>, %arg16: memref<1x64xf32, #tpu.memory_space<vmem>>, %arg17: memref<64x32xbf16, #tpu.memory_space<vmem>>, %arg18: memref<1x32xf32, #tpu.memory_space<vmem>>, %arg19: memref<1x32xf32, #tpu.memory_space<vmem>>, %arg20: memref<1x32xf32, #tpu.memory_space<vmem>>, %arg21: memref<1x8x32xf32, #tpu.memory_space<vmem>>, %arg22: memref<2x1x8x8xbf16, #tpu.memory_space<vmem>>, %arg23: memref<8x32xbf16, #tpu.memory_space<vmem>>, %arg24: memref<8x32xbf16, #tpu.memory_space<vmem>>) attributes {dimension_semantics = [#tpu.dimension_semantics<parallel>, #tpu.dimension_semantics<arbitrary>], iteration_bounds = array<i64: 2, 1>, scalar_prefetch = 0 : i64, scratch_operands = 2 : i64, tpu.core_type = #tpu.core_type<tc>, window_params = [{transform_indices = @transform_0, window_bounds = array<i64: 1, 8, 32>}, {transform_indices = @transform_1, window_bounds = array<i64: 1, 8, 1>}, {transform_indices = @transform_2, window_bounds = array<i64: 1, 8, 8>}, {pipeline_mode = #tpu.pipeline_mode<synchronous>, transform_indices = @transform_3, window_bounds = array<i64: 32, 32>}, {pipeline_mode = #tpu.pipeline_mode<synchronous>, transform_indices = @transform_4, window_bounds = array<i64: 1, 32>}, {pipeline_mode = #tpu.pipeline_mode<synchronous>, transform_indices = @transform_5, window_bounds = array<i64: 32, 32>}, {pipeline_mode = #tpu.pipeline_mode<synchronous>, transform_indices = @transform_6, window_bounds = array<i64: 1, 32>}, {pipeline_mode = #tpu.pipeline_mode<synchronous>, transform_indices = @transform_7, window_bounds = array<i64: 32, 32>}, {pipeline_mode = #tpu.pipeline_mode<synchronous>, transform_indices = @transform_8, window_bounds = array<i64: 1, 32>}, {pipeline_mode = #tpu.pipeline_mode<synchronous>, transform_indices = @transform_9, window_bounds = array<i64: 32, 32>}, {pipeline_mode = #tpu.pipeline_mode<synchronous>, transform_indices = @transform_10, window_bounds = array<i64: 1, 32>}, {pipeline_mode = #tpu.pipeline_mode<synchronous>, transform_indices = @transform_11, window_bounds = array<i64: 1, 32>}, {pipeline_mode = #tpu.pipeline_mode<synchronous>, transform_indices = @transform_12, window_bounds = array<i64: 1, 32>}, {pipeline_mode = #tpu.pipeline_mode<synchronous>, transform_indices = @transform_13, window_bounds = array<i64: 32, 64>}, {pipeline_mode = #tpu.pipeline_mode<synchronous>, transform_indices = @transform_14, window_bounds = array<i64: 1, 64>}, {pipeline_mode = #tpu.pipeline_mode<synchronous>, transform_indices = @transform_15, window_bounds = array<i64: 64, 32>}, {pipeline_mode = #tpu.pipeline_mode<synchronous>, transform_indices = @transform_16, window_bounds = array<i64: 1, 32>}, {pipeline_mode = #tpu.pipeline_mode<synchronous>, transform_indices = @transform_17, window_bounds = array<i64: 1, 32>}, {pipeline_mode = #tpu.pipeline_mode<synchronous>, transform_indices = @transform_18, window_bounds = array<i64: 1, 32>}, {transform_indices = @transform_19, window_bounds = array<i64: 1, 8, 32>}, {transform_indices = @transform_20, window_bounds = array<i64: 2, 1, 8, 8>}]} {
    %c0_i32 = arith.constant 0 : i32
    %0 = arith.cmpi eq, %arg1, %c0_i32 : i32
    %1 = arith.extui %0 : i1 to i32
    %c0_i32_0 = arith.constant 0 : i32
    %2 = arith.cmpi ne, %1, %c0_i32_0 : i32
    scf.if %2 {
      %c0_74 = arith.constant 0 : index
      %c0_75 = arith.constant 0 : index
      %c0_76 = arith.constant 0 : index
      %144 = vector.load %arg2[%c0_74, %c0_75, %c0_76] : memref<1x8x32xf32, #tpu.memory_space<vmem>>, vector<1x8x32xf32>
      %145 = vector.shape_cast %144 : vector<1x8x32xf32> to vector<8x32xf32>
      %146 = arith.truncf %145 : vector<8x32xf32> to vector<8x32xbf16>
      %c0_77 = arith.constant 0 : index
      %c0_78 = arith.constant 0 : index
      %147 = vector.load %arg7[%c0_77, %c0_78] : memref<32x32xbf16, #tpu.memory_space<vmem>>, vector<32x32xbf16>
      %cst_79 = arith.constant dense<0.000000e+00> : vector<8x32xf32>
      %148 = tpu.matmul %146, %147, %cst_79 {dimension_numbers = #tpu.dot_dimension_numbers<[1], [0], [0], [1], [0, 0, 1, 1], [], []>} : vector<8x32xbf16>, vector<32x32xbf16>, vector<8x32xf32> -> vector<8x32xf32>
      %c0_80 = arith.constant 0 : index
      %c0_81 = arith.constant 0 : index
      %149 = vector.load %arg8[%c0_80, %c0_81] : memref<1x32xf32, #tpu.memory_space<vmem>>, vector<1x32xf32>
      %150 = vector.broadcast %149 : vector<1x32xf32> to vector<8x32xf32>
      %151 = arith.addf %148, %150 : vector<8x32xf32>
      %152 = arith.truncf %151 : vector<8x32xf32> to vector<8x32xbf16>
      %c0_82 = arith.constant 0 : index
      %c0_83 = arith.constant 0 : index
      %153 = vector.load %arg23[%c0_82, %c0_83] : memref<8x32xbf16, #tpu.memory_space<vmem>>, vector<8x32xbf16>
      tpu.vector_store %arg23[%c0_82, %c0_83], %152 {strides = array<i32>} : memref<8x32xbf16, #tpu.memory_space<vmem>>, vector<8x32xbf16>,
      %c0_84 = arith.constant 0 : index
      %c0_85 = arith.constant 0 : index
      %154 = vector.load %arg9[%c0_84, %c0_85] : memref<32x32xbf16, #tpu.memory_space<vmem>>, vector<32x32xbf16>
      %cst_86 = arith.constant dense<0.000000e+00> : vector<8x32xf32>
      %155 = tpu.matmul %146, %154, %cst_86 {dimension_numbers = #tpu.dot_dimension_numbers<[1], [0], [0], [1], [0, 0, 1, 1], [], []>} : vector<8x32xbf16>, vector<32x32xbf16>, vector<8x32xf32> -> vector<8x32xf32>
      %c0_87 = arith.constant 0 : index
      %c0_88 = arith.constant 0 : index
      %156 = vector.load %arg10[%c0_87, %c0_88] : memref<1x32xf32, #tpu.memory_space<vmem>>, vector<1x32xf32>
      %157 = vector.broadcast %156 : vector<1x32xf32> to vector<8x32xf32>
      %158 = arith.addf %155, %157 : vector<8x32xf32>
      %159 = arith.truncf %158 : vector<8x32xf32> to vector<8x32xbf16>
      %c0_89 = arith.constant 0 : index
      %c0_90 = arith.constant 0 : index
      %160 = vector.load %arg24[%c0_89, %c0_90] : memref<8x32xbf16, #tpu.memory_space<vmem>>, vector<8x32xbf16>
      tpu.vector_store %arg24[%c0_89, %c0_90], %159 {strides = array<i32>} : memref<8x32xbf16, #tpu.memory_space<vmem>>, vector<8x32xbf16>,
    } else {
    }
    %c8_i32 = arith.constant 8 : i32
    %3 = arith.muli %arg1, %c8_i32 : i32
    %4 = tpu.assume_multiple %3, 8 : i32
    %c0 = arith.constant 0 : index
    %5 = arith.index_cast %4 : i32 to index
    %c0_1 = arith.constant 0 : index
    %6 = vector.load %arg2[%c0, %5, %c0_1] : memref<1x8x32xf32, #tpu.memory_space<vmem>>, vector<1x8x32xf32>
    %7 = vector.shape_cast %6 : vector<1x8x32xf32> to vector<8x32xf32>
    %8 = arith.truncf %7 : vector<8x32xf32> to vector<8x32xbf16>
    %c0_2 = arith.constant 0 : index
    %c0_3 = arith.constant 0 : index
    %c0_4 = arith.constant 0 : index
    %9 = vector.load %arg3[%c0_2, %c0_3, %c0_4] : memref<1x8x1xf32, #tpu.memory_space<vmem>>, vector<1x8x1xf32>
    %10 = vector.shape_cast %9 : vector<1x8x1xf32> to vector<8x1xf32>
    %c0_5 = arith.constant 0 : index
    %c0_6 = arith.constant 0 : index
    %c0_7 = arith.constant 0 : index
    %11 = vector.load %arg4[%c0_5, %c0_6, %c0_7] : memref<1x8x8xi8, #tpu.memory_space<vmem>>, vector<1x8x8xi8>
    %12 = vector.shape_cast %11 : vector<1x8x8xi8> to vector<8x8xi8>
    %c0_8 = arith.constant 0 : index
    %c0_9 = arith.constant 0 : index
    %13 = vector.load %arg5[%c0_8, %c0_9] : memref<32x32xbf16, #tpu.memory_space<vmem>>, vector<32x32xbf16>
    %cst = arith.constant dense<0.000000e+00> : vector<8x32xf32>
    %14 = tpu.matmul %8, %13, %cst {dimension_numbers = #tpu.dot_dimension_numbers<[1], [0], [0], [1], [0, 0, 1, 1], [], []>} : vector<8x32xbf16>, vector<32x32xbf16>, vector<8x32xf32> -> vector<8x32xf32>
    %c0_10 = arith.constant 0 : index
    %c0_11 = arith.constant 0 : index
    %15 = vector.load %arg6[%c0_10, %c0_11] : memref<1x32xf32, #tpu.memory_space<vmem>>, vector<1x32xf32>
    %16 = vector.broadcast %15 : vector<1x32xf32> to vector<8x32xf32>
    %17 = arith.addf %14, %16 : vector<8x32xf32>
    %18 = arith.truncf %17 : vector<8x32xf32> to vector<8x32xbf16>
    %19 = vector.extract_strided_slice %18 {offsets = [0, 0], sizes = [8, 16], strides = [1, 1]} : vector<8x32xbf16> to vector<8x16xbf16>
    %c0_12 = arith.constant 0 : index
    %c0_13 = arith.constant 0 : index
    %20 = vector.load %arg23[%c0_12, %c0_13] : memref<8x32xbf16, #tpu.memory_space<vmem>>, vector<8x16xbf16>
    %c0_14 = arith.constant 0 : index
    %c0_15 = arith.constant 0 : index
    %21 = vector.load %arg24[%c0_14, %c0_15] : memref<8x32xbf16, #tpu.memory_space<vmem>>, vector<8x16xbf16>
    %cst_16 = arith.constant dense<0.000000e+00> : vector<8x8xf32>
    %22 = tpu.matmul %19, %20, %cst_16 {dimension_numbers = #tpu.dot_dimension_numbers<[1], [1], [0], [0], [0, 0, 1, 0], [], []>} : vector<8x16xbf16>, vector<8x16xbf16>, vector<8x8xf32> -> vector<8x8xf32>
    %c0_i8 = arith.constant 0 : i8
    %23 = vector.broadcast %c0_i8 : i8 to vector<8x8xi8>
    %24 = arith.cmpi ne, %12, %23 : vector<8x8xi8>
    %cst_17 = arith.constant -1.000000e+30 : f32
    %25 = vector.broadcast %cst_17 : f32 to vector<8x8xf32>
    %26 = arith.select %24, %25, %22 : vector<8x8xi1>, vector<8x8xf32>
    %cst_18 = arith.constant dense<0xFF800000> : vector<8xf32>
    %27 = vector.multi_reduction <maximumf>, %26, %cst_18 [1] : vector<8x8xf32> to vector<8xf32>
    %28 = vector.shape_cast %27 : vector<8xf32> to vector<8x1xf32>
    %29 = vector.broadcast %28 : vector<8x1xf32> to vector<8x8xf32>
    %30 = arith.subf %26, %29 : vector<8x8xf32>
    %31 = math.exp %30 : vector<8x8xf32>
    %cst_19 = arith.constant dense<0.000000e+00> : vector<8xf32>
    %32 = vector.multi_reduction <add>, %31, %cst_19 [1] : vector<8x8xf32> to vector<8xf32>
    %33 = vector.shape_cast %32 : vector<8xf32> to vector<8x1xf32>
    %34 = vector.broadcast %33 : vector<8x1xf32> to vector<8x8xf32>
    %35 = arith.divf %31, %34 : vector<8x8xf32>
    %36 = arith.truncf %35 : vector<8x8xf32> to vector<8x8xbf16>
    %c0_20 = arith.constant 0 : index
    %c0_21 = arith.constant 0 : index
    %c0_22 = arith.constant 0 : index
    %c0_23 = arith.constant 0 : index
    %37 = vector.load %arg22[%c0_20, %c0_21, %c0_22, %c0_23] : memref<2x1x8x8xbf16, #tpu.memory_space<vmem>>, vector<1x1x8x8xbf16>
    %38 = vector.shape_cast %37 : vector<1x1x8x8xbf16> to vector<8x8xbf16>
    %39 = vector.shape_cast %36 : vector<8x8xbf16> to vector<1x1x8x8xbf16>
    tpu.vector_store %arg22[%c0_20, %c0_21, %c0_22, %c0_23], %39 {strides = array<i32>} : memref<2x1x8x8xbf16, #tpu.memory_space<vmem>>, vector<1x1x8x8xbf16>,
    %40 = arith.truncf %35 : vector<8x8xf32> to vector<8x8xbf16>
    %cst_24 = arith.constant dense<0.000000e+00> : vector<8x16xf32>
    %41 = tpu.matmul %40, %21, %cst_24 {dimension_numbers = #tpu.dot_dimension_numbers<[1], [0], [0], [1], [0, 0, 1, 1], [], []>} : vector<8x8xbf16>, vector<8x16xbf16>, vector<8x16xf32> -> vector<8x16xf32>
    %42 = arith.truncf %41 : vector<8x16xf32> to vector<8x16xbf16>
    %43 = vector.extract_strided_slice %18 {offsets = [0, 16], sizes = [8, 16], strides = [1, 1]} : vector<8x32xbf16> to vector<8x16xbf16>
    %c0_25 = arith.constant 0 : index
    %c16 = arith.constant 16 : index
    %44 = vector.load %arg23[%c0_25, %c16] : memref<8x32xbf16, #tpu.memory_space<vmem>>, vector<8x16xbf16>
    %c0_26 = arith.constant 0 : index
    %c16_27 = arith.constant 16 : index
    %45 = vector.load %arg24[%c0_26, %c16_27] : memref<8x32xbf16, #tpu.memory_space<vmem>>, vector<8x16xbf16>
    %cst_28 = arith.constant dense<0.000000e+00> : vector<8x8xf32>
    %46 = tpu.matmul %43, %44, %cst_28 {dimension_numbers = #tpu.dot_dimension_numbers<[1], [1], [0], [0], [0, 0, 1, 0], [], []>} : vector<8x16xbf16>, vector<8x16xbf16>, vector<8x8xf32> -> vector<8x8xf32>
    %c0_i8_29 = arith.constant 0 : i8
    %47 = vector.broadcast %c0_i8_29 : i8 to vector<8x8xi8>
    %48 = arith.cmpi ne, %12, %47 : vector<8x8xi8>
    %cst_30 = arith.constant -1.000000e+30 : f32
    %49 = vector.broadcast %cst_30 : f32 to vector<8x8xf32>
    %50 = arith.select %48, %49, %46 : vector<8x8xi1>, vector<8x8xf32>
    %cst_31 = arith.constant dense<0xFF800000> : vector<8xf32>
    %51 = vector.multi_reduction <maximumf>, %50, %cst_31 [1] : vector<8x8xf32> to vector<8xf32>
    %52 = vector.shape_cast %51 : vector<8xf32> to vector<8x1xf32>
    %53 = vector.broadcast %52 : vector<8x1xf32> to vector<8x8xf32>
    %54 = arith.subf %50, %53 : vector<8x8xf32>
    %55 = math.exp %54 : vector<8x8xf32>
    %cst_32 = arith.constant dense<0.000000e+00> : vector<8xf32>
    %56 = vector.multi_reduction <add>, %55, %cst_32 [1] : vector<8x8xf32> to vector<8xf32>
    %57 = vector.shape_cast %56 : vector<8xf32> to vector<8x1xf32>
    %58 = vector.broadcast %57 : vector<8x1xf32> to vector<8x8xf32>
    %59 = arith.divf %55, %58 : vector<8x8xf32>
    %60 = arith.truncf %59 : vector<8x8xf32> to vector<8x8xbf16>
    %c1 = arith.constant 1 : index
    %c0_33 = arith.constant 0 : index
    %c0_34 = arith.constant 0 : index
    %c0_35 = arith.constant 0 : index
    %61 = vector.load %arg22[%c1, %c0_33, %c0_34, %c0_35] : memref<2x1x8x8xbf16, #tpu.memory_space<vmem>>, vector<1x1x8x8xbf16>
    %62 = vector.shape_cast %61 : vector<1x1x8x8xbf16> to vector<8x8xbf16>
    %63 = vector.shape_cast %60 : vector<8x8xbf16> to vector<1x1x8x8xbf16>
    tpu.vector_store %arg22[%c1, %c0_33, %c0_34, %c0_35], %63 {strides = array<i32>} : memref<2x1x8x8xbf16, #tpu.memory_space<vmem>>, vector<1x1x8x8xbf16>,
    %64 = arith.truncf %59 : vector<8x8xf32> to vector<8x8xbf16>
    %cst_36 = arith.constant dense<0.000000e+00> : vector<8x16xf32>
    %65 = tpu.matmul %64, %45, %cst_36 {dimension_numbers = #tpu.dot_dimension_numbers<[1], [0], [0], [1], [0, 0, 1, 1], [], []>} : vector<8x8xbf16>, vector<8x16xbf16>, vector<8x16xf32> -> vector<8x16xf32>
    %66 = arith.truncf %65 : vector<8x16xf32> to vector<8x16xbf16>
    %67 = tpu.concatenate %42, %66 in 1 : vector<8x16xbf16>, vector<8x16xbf16> -> vector<8x32xbf16>
    %c0_37 = arith.constant 0 : index
    %c0_38 = arith.constant 0 : index
    %68 = vector.load %arg11[%c0_37, %c0_38] : memref<32x32xbf16, #tpu.memory_space<vmem>>, vector<32x32xbf16>
    %cst_39 = arith.constant dense<0.000000e+00> : vector<8x32xf32>
    %69 = tpu.matmul %67, %68, %cst_39 {dimension_numbers = #tpu.dot_dimension_numbers<[1], [0], [0], [1], [0, 0, 1, 1], [], []>} : vector<8x32xbf16>, vector<32x32xbf16>, vector<8x32xf32> -> vector<8x32xf32>
    %c0_40 = arith.constant 0 : index
    %c0_41 = arith.constant 0 : index
    %70 = vector.load %arg12[%c0_40, %c0_41] : memref<1x32xf32, #tpu.memory_space<vmem>>, vector<1x32xf32>
    %71 = vector.broadcast %70 : vector<1x32xf32> to vector<8x32xf32>
    %72 = arith.addf %69, %71 : vector<8x32xf32>
    %73 = arith.addf %72, %7 : vector<8x32xf32>
    %cst_42 = arith.constant dense<0.000000e+00> : vector<8xf32>
    %74 = vector.multi_reduction <add>, %73, %cst_42 [1] : vector<8x32xf32> to vector<8xf32>
    %75 = vector.shape_cast %74 : vector<8xf32> to vector<8x1xf32>
    %cst_43 = arith.constant 3.200000e+01 : f32
    %76 = vector.broadcast %cst_43 : f32 to vector<8x1xf32>
    %77 = arith.divf %75, %76 : vector<8x1xf32>
    %78 = vector.broadcast %77 : vector<8x1xf32> to vector<8x32xf32>
    %79 = arith.subf %73, %78 : vector<8x32xf32>
    %80 = arith.mulf %79, %79 : vector<8x32xf32>
    %cst_44 = arith.constant dense<0.000000e+00> : vector<8xf32>
    %81 = vector.multi_reduction <add>, %80, %cst_44 [1] : vector<8x32xf32> to vector<8xf32>
    %82 = vector.shape_cast %81 : vector<8xf32> to vector<8x1xf32>
    %cst_45 = arith.constant 3.200000e+01 : f32
    %83 = vector.broadcast %cst_45 : f32 to vector<8x1xf32>
    %84 = arith.divf %82, %83 : vector<8x1xf32>
    %85 = vector.broadcast %77 : vector<8x1xf32> to vector<8x32xf32>
    %86 = arith.subf %73, %85 : vector<8x32xf32>
    %cst_46 = arith.constant 9.99999974E-6 : f32
    %87 = vector.broadcast %cst_46 : f32 to vector<8x1xf32>
    %88 = arith.addf %84, %87 : vector<8x1xf32>
    %89 = math.rsqrt %88 : vector<8x1xf32>
    %90 = vector.broadcast %89 : vector<8x1xf32> to vector<8x32xf32>
    %91 = arith.mulf %86, %90 : vector<8x32xf32>
    %c0_47 = arith.constant 0 : index
    %c0_48 = arith.constant 0 : index
    %92 = vector.load %arg13[%c0_47, %c0_48] : memref<1x32xf32, #tpu.memory_space<vmem>>, vector<1x32xf32>
    %93 = vector.broadcast %92 : vector<1x32xf32> to vector<8x32xf32>
    %94 = arith.mulf %91, %93 : vector<8x32xf32>
    %c0_49 = arith.constant 0 : index
    %c0_50 = arith.constant 0 : index
    %95 = vector.load %arg14[%c0_49, %c0_50] : memref<1x32xf32, #tpu.memory_space<vmem>>, vector<1x32xf32>
    %96 = vector.broadcast %95 : vector<1x32xf32> to vector<8x32xf32>
    %97 = arith.addf %94, %96 : vector<8x32xf32>
    %98 = vector.broadcast %10 : vector<8x1xf32> to vector<8x32xf32>
    %99 = arith.mulf %97, %98 : vector<8x32xf32>
    %100 = arith.truncf %99 : vector<8x32xf32> to vector<8x32xbf16>
    %c0_51 = arith.constant 0 : index
    %c0_52 = arith.constant 0 : index
    %101 = vector.load %arg15[%c0_51, %c0_52] : memref<32x64xbf16, #tpu.memory_space<vmem>>, vector<32x64xbf16>
    %cst_53 = arith.constant dense<0.000000e+00> : vector<8x64xf32>
    %102 = tpu.matmul %100, %101, %cst_53 {dimension_numbers = #tpu.dot_dimension_numbers<[1], [0], [0], [1], [0, 0, 1, 1], [], []>} : vector<8x32xbf16>, vector<32x64xbf16>, vector<8x64xf32> -> vector<8x64xf32>
    %c0_54 = arith.constant 0 : index
    %c0_55 = arith.constant 0 : index
    %103 = vector.load %arg16[%c0_54, %c0_55] : memref<1x64xf32, #tpu.memory_space<vmem>>, vector<1x64xf32>
    %104 = vector.broadcast %103 : vector<1x64xf32> to vector<8x64xf32>
    %105 = arith.addf %102, %104 : vector<8x64xf32>
    %cst_56 = arith.constant 0.000000e+00 : f32
    %106 = vector.broadcast %cst_56 : f32 to vector<8x64xf32>
    %107 = arith.maximumf %105, %106 : vector<8x64xf32>
    %108 = arith.truncf %107 : vector<8x64xf32> to vector<8x64xbf16>
    %c0_57 = arith.constant 0 : index
    %c0_58 = arith.constant 0 : index
    %109 = vector.load %arg17[%c0_57, %c0_58] : memref<64x32xbf16, #tpu.memory_space<vmem>>, vector<64x32xbf16>
    %cst_59 = arith.constant dense<0.000000e+00> : vector<8x32xf32>
    %110 = tpu.matmul %108, %109, %cst_59 {dimension_numbers = #tpu.dot_dimension_numbers<[1], [0], [0], [1], [0, 0, 1, 1], [], []>} : vector<8x64xbf16>, vector<64x32xbf16>, vector<8x32xf32> -> vector<8x32xf32>
    %c0_60 = arith.constant 0 : index
    %c0_61 = arith.constant 0 : index
    %111 = vector.load %arg18[%c0_60, %c0_61] : memref<1x32xf32, #tpu.memory_space<vmem>>, vector<1x32xf32>
    %112 = vector.broadcast %111 : vector<1x32xf32> to vector<8x32xf32>
    %113 = arith.addf %110, %112 : vector<8x32xf32>
    %114 = arith.addf %113, %99 : vector<8x32xf32>
    %cst_62 = arith.constant dense<0.000000e+00> : vector<8xf32>
    %115 = vector.multi_reduction <add>, %114, %cst_62 [1] : vector<8x32xf32> to vector<8xf32>
    %116 = vector.shape_cast %115 : vector<8xf32> to vector<8x1xf32>
    %cst_63 = arith.constant 3.200000e+01 : f32
    %117 = vector.broadcast %cst_63 : f32 to vector<8x1xf32>
    %118 = arith.divf %116, %117 : vector<8x1xf32>
    %119 = vector.broadcast %118 : vector<8x1xf32> to vector<8x32xf32>
    %120 = arith.subf %114, %119 : vector<8x32xf32>
    %121 = arith.mulf %120, %120 : vector<8x32xf32>
    %cst_64 = arith.constant dense<0.000000e+00> : vector<8xf32>
    %122 = vector.multi_reduction <add>, %121, %cst_64 [1] : vector<8x32xf32> to vector<8xf32>
    %123 = vector.shape_cast %122 : vector<8xf32> to vector<8x1xf32>
    %cst_65 = arith.constant 3.200000e+01 : f32
    %124 = vector.broadcast %cst_65 : f32 to vector<8x1xf32>
    %125 = arith.divf %123, %124 : vector<8x1xf32>
    %126 = vector.broadcast %118 : vector<8x1xf32> to vector<8x32xf32>
    %127 = arith.subf %114, %126 : vector<8x32xf32>
    %cst_66 = arith.constant 9.99999974E-6 : f32
    %128 = vector.broadcast %cst_66 : f32 to vector<8x1xf32>
    %129 = arith.addf %125, %128 : vector<8x1xf32>
    %130 = math.rsqrt %129 : vector<8x1xf32>
    %131 = vector.broadcast %130 : vector<8x1xf32> to vector<8x32xf32>
    %132 = arith.mulf %127, %131 : vector<8x32xf32>
    %c0_67 = arith.constant 0 : index
    %c0_68 = arith.constant 0 : index
    %133 = vector.load %arg19[%c0_67, %c0_68] : memref<1x32xf32, #tpu.memory_space<vmem>>, vector<1x32xf32>
    %134 = vector.broadcast %133 : vector<1x32xf32> to vector<8x32xf32>
    %135 = arith.mulf %132, %134 : vector<8x32xf32>
    %c0_69 = arith.constant 0 : index
    %c0_70 = arith.constant 0 : index
    %136 = vector.load %arg20[%c0_69, %c0_70] : memref<1x32xf32, #tpu.memory_space<vmem>>, vector<1x32xf32>
    %137 = vector.broadcast %136 : vector<1x32xf32> to vector<8x32xf32>
    %138 = arith.addf %135, %137 : vector<8x32xf32>
    %139 = vector.broadcast %10 : vector<8x1xf32> to vector<8x32xf32>
    %140 = arith.mulf %138, %139 : vector<8x32xf32>
    %c0_71 = arith.constant 0 : index
    %c0_72 = arith.constant 0 : index
    %c0_73 = arith.constant 0 : index
    %141 = vector.load %arg21[%c0_71, %c0_72, %c0_73] : memref<1x8x32xf32, #tpu.memory_space<vmem>>, vector<1x8x32xf32>
    %142 = vector.shape_cast %141 : vector<1x8x32xf32> to vector<8x32xf32>
    %143 = vector.shape_cast %140 : vector<8x32xf32> to vector<1x8x32xf32>
    tpu.vector_store %arg21[%c0_71, %c0_72, %c0_73], %143 {strides = array<i32>} : memref<1x8x32xf32, #tpu.memory_space<vmem>>, vector<1x8x32xf32>,
    return
  }
  func.func @transform_0(%arg0: i32, %arg1: i32) -> (i32, i32, i32) {
    %c0_i32 = arith.constant 0 : i32
    %c0_i32_0 = arith.constant 0 : i32
    %c0_i32_1 = arith.constant 0 : i32
    return %arg0, %c0_i32, %c0_i32_0 : i32, i32, i32
  }
  func.func @transform_1(%arg0: i32, %arg1: i32) -> (i32, i32, i32) {
    %c0_i32 = arith.constant 0 : i32
    %c0_i32_0 = arith.constant 0 : i32
    return %arg0, %arg1, %c0_i32 : i32, i32, i32
  }
  func.func @transform_2(%arg0: i32, %arg1: i32) -> (i32, i32, i32) {
    %c0_i32 = arith.constant 0 : i32
    %c0_i32_0 = arith.constant 0 : i32
    return %arg0, %arg1, %c0_i32 : i32, i32, i32
  }
  func.func @transform_3(%arg0: i32, %arg1: i32) -> (i32, i32) {
    %c0_i32 = arith.constant 0 : i32
    %c0_i32_0 = arith.constant 0 : i32
    %c0_i32_1 = arith.constant 0 : i32
    return %c0_i32, %c0_i32_0 : i32, i32
  }
  func.func @transform_4(%arg0: i32, %arg1: i32) -> (i32, i32) {
    %c0_i32 = arith.constant 0 : i32
    %c0_i32_0 = arith.constant 0 : i32
    %c0_i32_1 = arith.constant 0 : i32
    return %c0_i32, %c0_i32_0 : i32, i32
  }
  func.func @transform_5(%arg0: i32, %arg1: i32) -> (i32, i32) {
    %c0_i32 = arith.constant 0 : i32
    %c0_i32_0 = arith.constant 0 : i32
    %c0_i32_1 = arith.constant 0 : i32
    return %c0_i32, %c0_i32_0 : i32, i32
  }
  func.func @transform_6(%arg0: i32, %arg1: i32) -> (i32, i32) {
    %c0_i32 = arith.constant 0 : i32
    %c0_i32_0 = arith.constant 0 : i32
    %c0_i32_1 = arith.constant 0 : i32
    return %c0_i32, %c0_i32_0 : i32, i32
  }
  func.func @transform_7(%arg0: i32, %arg1: i32) -> (i32, i32) {
    %c0_i32 = arith.constant 0 : i32
    %c0_i32_0 = arith.constant 0 : i32
    %c0_i32_1 = arith.constant 0 : i32
    return %c0_i32, %c0_i32_0 : i32, i32
  }
  func.func @transform_8(%arg0: i32, %arg1: i32) -> (i32, i32) {
    %c0_i32 = arith.constant 0 : i32
    %c0_i32_0 = arith.constant 0 : i32
    %c0_i32_1 = arith.constant 0 : i32
    return %c0_i32, %c0_i32_0 : i32, i32
  }
  func.func @transform_9(%arg0: i32, %arg1: i32) -> (i32, i32) {
    %c0_i32 = arith.constant 0 : i32
    %c0_i32_0 = arith.constant 0 : i32
    %c0_i32_1 = arith.constant 0 : i32
    return %c0_i32, %c0_i32_0 : i32, i32
  }
  func.func @transform_10(%arg0: i32, %arg1: i32) -> (i32, i32) {
    %c0_i32 = arith.constant 0 : i32
    %c0_i32_0 = arith.constant 0 : i32
    %c0_i32_1 = arith.constant 0 : i32
    return %c0_i32, %c0_i32_0 : i32, i32
  }
  func.func @transform_11(%arg0: i32, %arg1: i32) -> (i32, i32) {
    %c0_i32 = arith.constant 0 : i32
    %c0_i32_0 = arith.constant 0 : i32
    %c0_i32_1 = arith.constant 0 : i32
    return %c0_i32, %c0_i32_0 : i32, i32
  }
  func.func @transform_12(%arg0: i32, %arg1: i32) -> (i32, i32) {
    %c0_i32 = arith.constant 0 : i32
    %c0_i32_0 = arith.constant 0 : i32
    %c0_i32_1 = arith.constant 0 : i32
    return %c0_i32, %c0_i32_0 : i32, i32
  }
  func.func @transform_13(%arg0: i32, %arg1: i32) -> (i32, i32) {
    %c0_i32 = arith.constant 0 : i32
    %c0_i32_0 = arith.constant 0 : i32
    %c0_i32_1 = arith.constant 0 : i32
    return %c0_i32, %c0_i32_0 : i32, i32
  }
  func.func @transform_14(%arg0: i32, %arg1: i32) -> (i32, i32) {
    %c0_i32 = arith.constant 0 : i32
    %c0_i32_0 = arith.constant 0 : i32
    %c0_i32_1 = arith.constant 0 : i32
    return %c0_i32, %c0_i32_0 : i32, i32
  }
  func.func @transform_15(%arg0: i32, %arg1: i32) -> (i32, i32) {
    %c0_i32 = arith.constant 0 : i32
    %c0_i32_0 = arith.constant 0 : i32
    %c0_i32_1 = arith.constant 0 : i32
    return %c0_i32, %c0_i32_0 : i32, i32
  }
  func.func @transform_16(%arg0: i32, %arg1: i32) -> (i32, i32) {
    %c0_i32 = arith.constant 0 : i32
    %c0_i32_0 = arith.constant 0 : i32
    %c0_i32_1 = arith.constant 0 : i32
    return %c0_i32, %c0_i32_0 : i32, i32
  }
  func.func @transform_17(%arg0: i32, %arg1: i32) -> (i32, i32) {
    %c0_i32 = arith.constant 0 : i32
    %c0_i32_0 = arith.constant 0 : i32
    %c0_i32_1 = arith.constant 0 : i32
    return %c0_i32, %c0_i32_0 : i32, i32
  }
  func.func @transform_18(%arg0: i32, %arg1: i32) -> (i32, i32) {
    %c0_i32 = arith.constant 0 : i32
    %c0_i32_0 = arith.constant 0 : i32
    %c0_i32_1 = arith.constant 0 : i32
    return %c0_i32, %c0_i32_0 : i32, i32
  }
  func.func @transform_19(%arg0: i32, %arg1: i32) -> (i32, i32, i32) {
    %c0_i32 = arith.constant 0 : i32
    %c0_i32_0 = arith.constant 0 : i32
    return %arg0, %arg1, %c0_i32 : i32, i32, i32
  }
  func.func @transform_20(%arg0: i32, %arg1: i32) -> (i32, i32, i32, i32) {
    %c0_i32 = arith.constant 0 : i32
    %c0_i32_0 = arith.constant 0 : i32
    %c0_i32_1 = arith.constant 0 : i32
    return %c0_i32, %arg0, %arg1, %c0_i32_0 : i32, i32, i32, i32
  }
}

</mosaic_0001>

<llo_original>
// kernel: tpu_custom_call.1
$region0: #{tpu_custom_call.1}
  #allocation0 [shape = 'u32[]', space=smem, size = 0x4, offset = 0x4, fixed_abs, tag = 'smem constant byte address 0x4 - core index']
  #allocation1 [shape = 'u32[72,128]{1,0:T(1,128)}', space=vmem, size = 0x9000, scoped, tag = 'internal scratch']
  #allocation2 [shape = 'bf16[8,32]{1,0:T(8,128)(2,1)}', space=vmem, size = 0x800, scoped, tag = 'scratch operand']
  #allocation3 [shape = 'bf16[8,32]{1,0:T(8,128)(2,1)}', space=vmem, size = 0x800, scoped, tag = 'scratch operand']
  %s0 = inlined_call_operand.vmem [shape: f32[2,8,32], index: 0, kind: input, shape index: {}]
  %s1 = inlined_call_operand.vmem [shape: f32[2,8,1], index: 1, kind: input, shape index: {}]
  %s2 = inlined_call_operand.hbm [shape: s8[2,8,8], index: 2, kind: input, shape index: {}]
  %s3 = inlined_call_operand.vmem [shape: bf16[32,32], index: 3, kind: input, shape index: {}]
  %s4 = inlined_call_operand.hbm [shape: f32[1,32], index: 4, kind: input, shape index: {}]
  %s5 = inlined_call_operand.vmem [shape: bf16[32,32], index: 5, kind: input, shape index: {}]
  %s6 = inlined_call_operand.hbm [shape: f32[1,32], index: 6, kind: input, shape index: {}]
  %s7 = inlined_call_operand.vmem [shape: bf16[32,32], index: 7, kind: input, shape index: {}]
  %s8 = inlined_call_operand.hbm [shape: f32[1,32], index: 8, kind: input, shape index: {}]
  %s9 = inlined_call_operand.hbm [shape: bf16[32,32], index: 9, kind: input, shape index: {}]
  %s10 = inlined_call_operand.hbm [shape: f32[1,32], index: 10, kind: input, shape index: {}]
  %s11 = inlined_call_operand.hbm [shape: f32[1,32], index: 11, kind: input, shape index: {}]
  %s12 = inlined_call_operand.hbm [shape: f32[1,32], index: 12, kind: input, shape index: {}]
  %s13 = inlined_call_operand.hbm [shape: bf16[32,64], index: 13, kind: input, shape index: {}]
  %s14 = inlined_call_operand.hbm [shape: f32[1,64], index: 14, kind: input, shape index: {}]
  %s15 = inlined_call_operand.vmem [shape: bf16[64,32], index: 15, kind: input, shape index: {}]
  %s16 = inlined_call_operand.vmem [shape: f32[1,32], index: 16, kind: input, shape index: {}]
  %s17 = inlined_call_operand.vmem [shape: f32[1,32], index: 17, kind: input, shape index: {}]
  %s18 = inlined_call_operand.vmem [shape: f32[1,32], index: 18, kind: input, shape index: {}]
  %s19 = inlined_call_operand.hbm [shape: f32[2,8,32], index: 19, kind: output, shape index: {0}]
  %s20 = inlined_call_operand.hbm [shape: bf16[2,2,8,8], index: 20, kind: output, shape index: {1}]
  %21 = xla_tuple %s19, %s20
  %s22 = sld [smem:[#allocation0]]
  $region161: #{tpu_custom_call.1} parent=0
    _
  %s24 = ssub.s32 1, %s22
  %s25 = scalar_select 0, %s24, %s22
  $region1: #{tpu_custom_call.1} parent=0
    #allocation4 [shape = 'u8[2048]{0}', space=vmem, size = 0x800, scoped, tag = 'input window, operand 2']
    #allocation5 [shape = 's32[2]{0}', space=sflag, size = 0x8, scoped, tag = 'scoped memory for tpu_custom_call.1']
    #allocation6 [shape = 's32[2]{0}', space=sflag, size = 0x8, scoped, tag = 'scoped memory for tpu_custom_call.1']
    #allocation7 [shape = 'u8[512]{0}', space=vmem, size = 0x400, scoped, tag = 'input window, operand 4, single buffered']
    #allocation8 [shape = 's32[1]{0}', space=sflag, size = 0x4, scoped, tag = 'scoped memory for tpu_custom_call.1']
    #allocation9 [shape = 'u8[512]{0}', space=vmem, size = 0x400, scoped, tag = 'input window, operand 6, single buffered']
    #allocation10 [shape = 'u8[512]{0}', space=vmem, size = 0x400, scoped, tag = 'input window, operand 8, single buffered']
    #allocation11 [shape = 's32[1]{0}', space=sflag, size = 0x4, scoped, tag = 'scoped memory for tpu_custom_call.1']
    #allocation12 [shape = 'u8[8192]{0}', space=vmem, size = 0x2000, scoped, tag = 'input window, operand 9, single buffered']
    #allocation13 [shape = 'u8[512]{0}', space=vmem, size = 0x400, scoped, tag = 'input window, operand 10, single buffered']
    #allocation14 [shape = 's32[1]{0}', space=sflag, size = 0x4, scoped, tag = 'scoped memory for tpu_custom_call.1']
    #allocation15 [shape = 'u8[512]{0}', space=vmem, size = 0x400, scoped, tag = 'input window, operand 11, single buffered']
    #allocation16 [shape = 'u8[512]{0}', space=vmem, size = 0x400, scoped, tag = 'input window, operand 12, single buffered']
    #allocation17 [shape = 's32[1]{0}', space=sflag, size = 0x4, scoped, tag = 'scoped memory for tpu_custom_call.1']
    #allocation18 [shape = 'u8[8192]{0}', space=vmem, size = 0x2000, scoped, tag = 'input window, operand 13, single buffered']
    #allocation19 [shape = 'u8[512]{0}', space=vmem, size = 0x400, scoped, tag = 'input window, operand 14, single buffered']
    #allocation20 [shape = 's32[1]{0}', space=sflag, size = 0x4, scoped, tag = 'scoped memory for tpu_custom_call.1']
    #allocation21 [shape = 'u8[8192]{0}', space=vmem, size = 0x2000, scoped, tag = 'output window, operand 0']
    #allocation22 [shape = 'u8[8192]{0}', space=vmem, size = 0x2000, scoped, tag = 'output window, operand 1']
    #allocation23 [shape = 's32[2]{0}', space=sflag, size = 0x8, scoped, tag = 'scoped memory for tpu_custom_call.1']
    %26 = vsyncpa [#allocation5], 0
    %s27 = scalar_lea.sflag [#allocation5], 1
    %28 = vsyncpa %s27, 0
    %29 = vsyncpa [#allocation8], 0
    %30 = vsyncpa [#allocation11], 0
    %31 = vsyncpa [#allocation14], 0
    %32 = vsyncpa [#allocation17], 0
    %33 = vsyncpa [#allocation20], 0
    %34 = vsyncpa [#allocation6], 0
    %s35 = scalar_lea.sflag [#allocation6], 1
    %36 = vsyncpa %s35, 0
    %37 = vsyncpa [#allocation23], 0
    %s38 = scalar_lea.sflag [#allocation23], 1
    %39 = vsyncpa %s38, 0
    loop: start=0, step=1, limit=4
    $region2: #{tpu_custom_call.1} parent=1 // loop_pre_header
      _
    $region3: #{tpu_custom_call.1} parent=1 // loop_header
      %s41 = sphi 0, %s45
      %p42 = scmp.ge.s32.totalorder %s41, 4
      %s48 = sphi 0, %s60
      %s49 = sphi 0, %s56
      %s50 = sphi 0, %s48
      %s51 = sphi 0, %s49
      %s52 = sphi 0, %s50
      %s53 = sphi 0, %s51
      %s63 = sphi 0, %s65
      %s66 = sphi 0, %s63
      %s67 = sphi 0, %s66
      %s83 = sphi 0, %s67
      %s91 = sphi 0, %s93
      %s94 = sphi 0, %s91
      %s95 = sphi 0, %s94
      %s111 = sphi 0, %s95
      %s119 = sphi 0, %s121
      %s122 = sphi 0, %s119
      %s123 = sphi 0, %s122
      %s139 = sphi 0, %s123
      %s143 = sphi 0, %s143
      %s145 = sphi 0, %s143
      %s146 = sphi 0, %s145
      %s160 = sphi 0, %s146
      %s164 = sphi 0, %s164
      %s166 = sphi 0, %s164
      %s167 = sphi 0, %s166
      %s181 = sphi 0, %s167
      %s185 = sphi 0, %s185
      %s187 = sphi 0, %s185
      %s188 = sphi 0, %s187
      %s202 = sphi 0, %s188
      %s206 = sphi 0, %s206
      %s208 = sphi 0, %s206
      %s209 = sphi 0, %s208
      %s223 = sphi 0, %s209
      %s227 = sphi 0, %s227
      %s229 = sphi 0, %s227
      %s230 = sphi 0, %s229
      %s244 = sphi 0, %s230
      %s248 = sphi 0, %s248
      %s250 = sphi 0, %s248
      %s251 = sphi 0, %s250
      %s265 = sphi 0, %s251
      %s269 = sphi 0, %s269
      %s271 = sphi 0, %s269
      %s272 = sphi 0, %s271
      %s286 = sphi 0, %s272
      %s290 = sphi 0, %s290
      %s292 = sphi 0, %s290
      %s293 = sphi 0, %s292
      %s307 = sphi 0, %s293
      %s311 = sphi 0, %s311
      %s313 = sphi 0, %s311
      %s314 = sphi 0, %s313
      %s328 = sphi 0, %s314
      %s332 = sphi 0, %s332
      %s334 = sphi 0, %s332
      %s335 = sphi 0, %s334
      %s349 = sphi 0, %s335
      %s353 = sphi 0, %s353
      %s355 = sphi 0, %s353
      %s356 = sphi 0, %s355
      %s370 = sphi 0, %s356
      %s374 = sphi 0, %s374
      %s376 = sphi 0, %s374
      %s377 = sphi 0, %s376
      %s391 = sphi 0, %s377
      %s395 = sphi 0, %s395
      %s397 = sphi 0, %s395
      %s398 = sphi 0, %s397
      %s412 = sphi 0, %s398
      %s416 = sphi 0, %s416
      %s418 = sphi 0, %s416
      %s419 = sphi 0, %s418
      %s433 = sphi 0, %s419
      %s437 = sphi 0, %s437
      %s439 = sphi 0, %s437
      %s440 = sphi 0, %s439
      %s454 = sphi 0, %s440
      %s458 = sphi 0, %s458
      %s460 = sphi 0, %s458
      %s461 = sphi 0, %s460
      %s475 = sphi 0, %s461
      %s483 = sphi 0, %s485
      %s486 = sphi 0, %s483
      %s487 = sphi 0, %s486
      %s503 = sphi 0, %s487
      %s511 = sphi 0, %s513
      %s514 = sphi 0, %s511
      %s515 = sphi 0, %s514
      %s531 = sphi 0, %s515
    $region4: #{tpu_custom_call.1} parent=1 // loop_header_branch
      %44 = sbr.rel (%p42) target = $region8
    $region5: #{tpu_custom_call.1} parent=1 // loop_body
      %s46 = ssub.s32 %s41, 1
      %s47 = ssub.s32 %s41, 2
      %s54 = sadd.s32 1, %s49
      %p55 = scmp.ge.s32.totalorder %s54, 1
      %s56 = scalar_select %p55, 0, %s54
      %s57 = sadd.s32 1, %s48
      %s58 = scalar_select %p55, %s57, %s48
      %p59 = scmp.ge.s32.totalorder %s58, 2
      %s60 = scalar_select %p59, 0, %s58
      %s61 = ssub.s32 %s48, %s60
      %p62 = scmp.eq.s32.totalorder %s61, 0
      %s64 = sadd.s32 %s63, 1
      %s65 = scalar_select %p62, %s63, %s64
      %p68 = pneg %p62
      %p69 = scmp.eq.s32.totalorder %s41, 1
      %p70 = por %p68, %p69
      %p71 = scmp.ne.s32.totalorder %s63, %s66
      %p72 = scmp.eq.s32.totalorder %s41, 0
      %p73 = por %p71, %p72
      %p74 = scmp.ne.s32.totalorder %s63, %s66
      %p75 = scmp.eq.s32.totalorder %s46, 1
      %p76 = por %p74, %p75
      %p77 = scmp.ne.s32.totalorder %s66, %s67
      %p78 = scmp.eq.s32.totalorder %s46, 0
      %p79 = por %p77, %p78
      %p80 = scmp.ne.s32.totalorder %s66, %s67
      %p81 = scmp.eq.s32.totalorder %s47, 1
      %p82 = por %p80, %p81
      %p84 = scmp.ne.s32.totalorder %s67, %s83
      %p85 = scmp.eq.s32.totalorder %s47, 0
      %p86 = por %p84, %p85
      %s87 = ssub.s32 %s48, %s60
      %s88 = ssub.s32 %s49, %s56
      %s89 = sor.u32 %s87, %s88
      %p90 = scmp.eq.s32.totalorder %s89, 0
      %s92 = sadd.s32 %s91, 1
      %s93 = scalar_select %p90, %s91, %s92
      %p96 = pneg %p90
      %p97 = scmp.eq.s32.totalorder %s41, 1
      %p98 = por %p96, %p97
      %p99 = scmp.ne.s32.totalorder %s91, %s94
      %p100 = scmp.eq.s32.totalorder %s41, 0
      %p101 = por %p99, %p100
      %p102 = scmp.ne.s32.totalorder %s91, %s94
      %p103 = scmp.eq.s32.totalorder %s46, 1
      %p104 = por %p102, %p103
      %p105 = scmp.ne.s32.totalorder %s94, %s95
      %p106 = scmp.eq.s32.totalorder %s46, 0
      %p107 = por %p105, %p106
      %p108 = scmp.ne.s32.totalorder %s94, %s95
      %p109 = scmp.eq.s32.totalorder %s47, 1
      %p110 = por %p108, %p109
      %p112 = scmp.ne.s32.totalorder %s95, %s111
      %p113 = scmp.eq.s32.totalorder %s47, 0
      %p114 = por %p112, %p113
      %s115 = ssub.s32 %s48, %s60
      %s116 = ssub.s32 %s49, %s56
      %s117 = sor.u32 %s115, %s116
      %p118 = scmp.eq.s32.totalorder %s117, 0
      %s120 = sadd.s32 %s119, 1
      %s121 = scalar_select %p118, %s119, %s120
      %p124 = pneg %p118
      %p125 = scmp.eq.s32.totalorder %s41, 1
      %p126 = por %p124, %p125
      %p127 = scmp.ne.s32.totalorder %s119, %s122
      %p128 = scmp.eq.s32.totalorder %s41, 0
      %p129 = por %p127, %p128
      %p130 = scmp.ne.s32.totalorder %s119, %s122
      %p131 = scmp.eq.s32.totalorder %s46, 1
      %p132 = por %p130, %p131
      %p133 = scmp.ne.s32.totalorder %s122, %s123
      %p134 = scmp.eq.s32.totalorder %s46, 0
      %p135 = por %p133, %p134
      %p136 = scmp.ne.s32.totalorder %s122, %s123
      %p137 = scmp.eq.s32.totalorder %s47, 1
      %p138 = por %p136, %p137
      %p140 = scmp.ne.s32.totalorder %s123, %s139
      %p141 = scmp.eq.s32.totalorder %s47, 0
      %p142 = por %p140, %p141
      %s144 = sadd.s32 %s143, 1
      %p147 = scmp.eq.s32.totalorder %s41, 1
      %p148 = scmp.ne.s32.totalorder %s143, %s145
      %p149 = scmp.eq.s32.totalorder %s41, 0
      %p150 = por %p148, %p149
      %p151 = scmp.ne.s32.totalorder %s143, %s145
      %p152 = scmp.eq.s32.totalorder %s46, 1
      %p153 = por %p151, %p152
      %p154 = scmp.ne.s32.totalorder %s145, %s146
      %p155 = scmp.eq.s32.totalorder %s46, 0
      %p156 = por %p154, %p155
      %p157 = scmp.ne.s32.totalorder %s145, %s146
      %p158 = scmp.eq.s32.totalorder %s47, 1
      %p159 = por %p157, %p158
      %p161 = scmp.ne.s32.totalorder %s146, %s160
      %p162 = scmp.eq.s32.totalorder %s47, 0
      %p163 = por %p161, %p162
      %s165 = sadd.s32 %s164, 1
      %p168 = scmp.eq.s32.totalorder %s41, 1
      %p169 = scmp.ne.s32.totalorder %s164, %s166
      %p170 = scmp.eq.s32.totalorder %s41, 0
      %p171 = por %p169, %p170
      %p172 = scmp.ne.s32.totalorder %s164, %s166
      %p173 = scmp.eq.s32.totalorder %s46, 1
      %p174 = por %p172, %p173
      %p175 = scmp.ne.s32.totalorder %s166, %s167
      %p176 = scmp.eq.s32.totalorder %s46, 0
      %p177 = por %p175, %p176
      %p178 = scmp.ne.s32.totalorder %s166, %s167
      %p179 = scmp.eq.s32.totalorder %s47, 1
      %p180 = por %p178, %p179
      %p182 = scmp.ne.s32.totalorder %s167, %s181
      %p183 = scmp.eq.s32.totalorder %s47, 0
      %p184 = por %p182, %p183
      %s186 = sadd.s32 %s185, 1
      %p189 = scmp.eq.s32.totalorder %s41, 1
      %p190 = scmp.ne.s32.totalorder %s185, %s187
      %p191 = scmp.eq.s32.totalorder %s41, 0
      %p192 = por %p190, %p191
      %p193 = scmp.ne.s32.totalorder %s185, %s187
      %p194 = scmp.eq.s32.totalorder %s46, 1
      %p195 = por %p193, %p194
      %p196 = scmp.ne.s32.totalorder %s187, %s188
      %p197 = scmp.eq.s32.totalorder %s46, 0
      %p198 = por %p196, %p197
      %p199 = scmp.ne.s32.totalorder %s187, %s188
      %p200 = scmp.eq.s32.totalorder %s47, 1
      %p201 = por %p199, %p200
      %p203 = scmp.ne.s32.totalorder %s188, %s202
      %p204 = scmp.eq.s32.totalorder %s47, 0
      %p205 = por %p203, %p204
      %s207 = sadd.s32 %s206, 1
      %p210 = scmp.eq.s32.totalorder %s41, 1
      %p211 = scmp.ne.s32.totalorder %s206, %s208
      %p212 = scmp.eq.s32.totalorder %s41, 0
      %p213 = por %p211, %p212
      %p214 = scmp.ne.s32.totalorder %s206, %s208
      %p215 = scmp.eq.s32.totalorder %s46, 1
      %p216 = por %p214, %p215
      %p217 = scmp.ne.s32.totalorder %s208, %s209
      %p218 = scmp.eq.s32.totalorder %s46, 0
      %p219 = por %p217, %p218
      %p220 = scmp.ne.s32.totalorder %s208, %s209
      %p221 = scmp.eq.s32.totalorder %s47, 1
      %p222 = por %p220, %p221
      %p224 = scmp.ne.s32.totalorder %s209, %s223
      %p225 = scmp.eq.s32.totalorder %s47, 0
      %p226 = por %p224, %p225
      %s228 = sadd.s32 %s227, 1
      %p231 = scmp.eq.s32.totalorder %s41, 1
      %p232 = scmp.ne.s32.totalorder %s227, %s229
      %p233 = scmp.eq.s32.totalorder %s41, 0
      %p234 = por %p232, %p233
      %p235 = scmp.ne.s32.totalorder %s227, %s229
      %p236 = scmp.eq.s32.totalorder %s46, 1
      %p237 = por %p235, %p236
      %p238 = scmp.ne.s32.totalorder %s229, %s230
      %p239 = scmp.eq.s32.totalorder %s46, 0
      %p240 = por %p238, %p239
      %p241 = scmp.ne.s32.totalorder %s229, %s230
      %p242 = scmp.eq.s32.totalorder %s47, 1
      %p243 = por %p241, %p242
      %p245 = scmp.ne.s32.totalorder %s230, %s244
      %p246 = scmp.eq.s32.totalorder %s47, 0
      %p247 = por %p245, %p246
      %s249 = sadd.s32 %s248, 1
      %p252 = scmp.eq.s32.totalorder %s41, 1
      %p253 = scmp.ne.s32.totalorder %s248, %s250
      %p254 = scmp.eq.s32.totalorder %s41, 0
      %p255 = por %p253, %p254
      %p256 = scmp.ne.s32.totalorder %s248, %s250
      %p257 = scmp.eq.s32.totalorder %s46, 1
      %p258 = por %p256, %p257
      %p259 = scmp.ne.s32.totalorder %s250, %s251
      %p260 = scmp.eq.s32.totalorder %s46, 0
      %p261 = por %p259, %p260
      %p262 = scmp.ne.s32.totalorder %s250, %s251
      %p263 = scmp.eq.s32.totalorder %s47, 1
      %p264 = por %p262, %p263
      %p266 = scmp.ne.s32.totalorder %s251, %s265
      %p267 = scmp.eq.s32.totalorder %s47, 0
      %p268 = por %p266, %p267
      %s270 = sadd.s32 %s269, 1
      %p273 = scmp.eq.s32.totalorder %s41, 1
      %p274 = scmp.ne.s32.totalorder %s269, %s271
      %p275 = scmp.eq.s32.totalorder %s41, 0
      %p276 = por %p274, %p275
      %p277 = scmp.ne.s32.totalorder %s269, %s271
      %p278 = scmp.eq.s32.totalorder %s46, 1
      %p279 = por %p277, %p278
      %p280 = scmp.ne.s32.totalorder %s271, %s272
      %p281 = scmp.eq.s32.totalorder %s46, 0
      %p282 = por %p280, %p281
      %p283 = scmp.ne.s32.totalorder %s271, %s272
      %p284 = scmp.eq.s32.totalorder %s47, 1
      %p285 = por %p283, %p284
      %p287 = scmp.ne.s32.totalorder %s272, %s286
      %p288 = scmp.eq.s32.totalorder %s47, 0
      %p289 = por %p287, %p288
      %s291 = sadd.s32 %s290, 1
      %p294 = scmp.eq.s32.totalorder %s41, 1
      %p295 = scmp.ne.s32.totalorder %s290, %s292
      %p296 = scmp.eq.s32.totalorder %s41, 0
      %p297 = por %p295, %p296
      %p298 = scmp.ne.s32.totalorder %s290, %s292
      %p299 = scmp.eq.s32.totalorder %s46, 1
      %p300 = por %p298, %p299
      %p301 = scmp.ne.s32.totalorder %s292, %s293
      %p302 = scmp.eq.s32.totalorder %s46, 0
      %p303 = por %p301, %p302
      %p304 = scmp.ne.s32.totalorder %s292, %s293
      %p305 = scmp.eq.s32.totalorder %s47, 1
      %p306 = por %p304, %p305
      %p308 = scmp.ne.s32.totalorder %s293, %s307
      %p309 = scmp.eq.s32.totalorder %s47, 0
      %p310 = por %p308, %p309
      %s312 = sadd.s32 %s311, 1
      %p315 = scmp.eq.s32.totalorder %s41, 1
      %p316 = scmp.ne.s32.totalorder %s311, %s313
      %p317 = scmp.eq.s32.totalorder %s41, 0
      %p318 = por %p316, %p317
      %p319 = scmp.ne.s32.totalorder %s311, %s313
      %p320 = scmp.eq.s32.totalorder %s46, 1
      %p321 = por %p319, %p320
      %p322 = scmp.ne.s32.totalorder %s313, %s314
      %p323 = scmp.eq.s32.totalorder %s46, 0
      %p324 = por %p322, %p323
      %p325 = scmp.ne.s32.totalorder %s313, %s314
      %p326 = scmp.eq.s32.totalorder %s47, 1
      %p327 = por %p325, %p326
      %p329 = scmp.ne.s32.totalorder %s314, %s328
      %p330 = scmp.eq.s32.totalorder %s47, 0
      %p331 = por %p329, %p330
      %s333 = sadd.s32 %s332, 1
      %p336 = scmp.eq.s32.totalorder %s41, 1
      %p337 = scmp.ne.s32.totalorder %s332, %s334
      %p338 = scmp.eq.s32.totalorder %s41, 0
      %p339 = por %p337, %p338
      %p340 = scmp.ne.s32.totalorder %s332, %s334
      %p341 = scmp.eq.s32.totalorder %s46, 1
      %p342 = por %p340, %p341
      %p343 = scmp.ne.s32.totalorder %s334, %s335
      %p344 = scmp.eq.s32.totalorder %s46, 0
      %p345 = por %p343, %p344
      %p346 = scmp.ne.s32.totalorder %s334, %s335
      %p347 = scmp.eq.s32.totalorder %s47, 1
      %p348 = por %p346, %p347
      %p350 = scmp.ne.s32.totalorder %s335, %s349
      %p351 = scmp.eq.s32.totalorder %s47, 0
      %p352 = por %p350, %p351
      %s354 = sadd.s32 %s353, 1
      %p357 = scmp.eq.s32.totalorder %s41, 1
      %p358 = scmp.ne.s32.totalorder %s353, %s355
      %p359 = scmp.eq.s32.totalorder %s41, 0
      %p360 = por %p358, %p359
      %p361 = scmp.ne.s32.totalorder %s353, %s355
      %p362 = scmp.eq.s32.totalorder %s46, 1
      %p363 = por %p361, %p362
      %p364 = scmp.ne.s32.totalorder %s355, %s356
      %p365 = scmp.eq.s32.totalorder %s46, 0
      %p366 = por %p364, %p365
      %p367 = scmp.ne.s32.totalorder %s355, %s356
      %p368 = scmp.eq.s32.totalorder %s47, 1
      %p369 = por %p367, %p368
      %p371 = scmp.ne.s32.totalorder %s356, %s370
      %p372 = scmp.eq.s32.totalorder %s47, 0
      %p373 = por %p371, %p372
      %s375 = sadd.s32 %s374, 1
      %p378 = scmp.eq.s32.totalorder %s41, 1
      %p379 = scmp.ne.s32.totalorder %s374, %s376
      %p380 = scmp.eq.s32.totalorder %s41, 0
      %p381 = por %p379, %p380
      %p382 = scmp.ne.s32.totalorder %s374, %s376
      %p383 = scmp.eq.s32.totalorder %s46, 1
      %p384 = por %p382, %p383
      %p385 = scmp.ne.s32.totalorder %s376, %s377
      %p386 = scmp.eq.s32.totalorder %s46, 0
      %p387 = por %p385, %p386
      %p388 = scmp.ne.s32.totalorder %s376, %s377
      %p389 = scmp.eq.s32.totalorder %s47, 1
      %p390 = por %p388, %p389
      %p392 = scmp.ne.s32.totalorder %s377, %s391
      %p393 = scmp.eq.s32.totalorder %s47, 0
      %p394 = por %p392, %p393
      %s396 = sadd.s32 %s395, 1
      %p399 = scmp.eq.s32.totalorder %s41, 1
      %p400 = scmp.ne.s32.totalorder %s395, %s397
      %p401 = scmp.eq.s32.totalorder %s41, 0
      %p402 = por %p400, %p401
      %p403 = scmp.ne.s32.totalorder %s395, %s397
      %p404 = scmp.eq.s32.totalorder %s46, 1
      %p405 = por %p403, %p404
      %p406 = scmp.ne.s32.totalorder %s397, %s398
      %p407 = scmp.eq.s32.totalorder %s46, 0
      %p408 = por %p406, %p407
      %p409 = scmp.ne.s32.totalorder %s397, %s398
      %p410 = scmp.eq.s32.totalorder %s47, 1
      %p411 = por %p409, %p410
      %p413 = scmp.ne.s32.totalorder %s398, %s412
      %p414 = scmp.eq.s32.totalorder %s47, 0
      %p415 = por %p413, %p414
      %s417 = sadd.s32 %s416, 1
      %p420 = scmp.eq.s32.totalorder %s41, 1
      %p421 = scmp.ne.s32.totalorder %s416, %s418
      %p422 = scmp.eq.s32.totalorder %s41, 0
      %p423 = por %p421, %p422
      %p424 = scmp.ne.s32.totalorder %s416, %s418
      %p425 = scmp.eq.s32.totalorder %s46, 1
      %p426 = por %p424, %p425
      %p427 = scmp.ne.s32.totalorder %s418, %s419
      %p428 = scmp.eq.s32.totalorder %s46, 0
      %p429 = por %p427, %p428
      %p430 = scmp.ne.s32.totalorder %s418, %s419
      %p431 = scmp.eq.s32.totalorder %s47, 1
      %p432 = por %p430, %p431
      %p434 = scmp.ne.s32.totalorder %s419, %s433
      %p435 = scmp.eq.s32.totalorder %s47, 0
      %p436 = por %p434, %p435
      %s438 = sadd.s32 %s437, 1
      %p441 = scmp.eq.s32.totalorder %s41, 1
      %p442 = scmp.ne.s32.totalorder %s437, %s439
      %p443 = scmp.eq.s32.totalorder %s41, 0
      %p444 = por %p442, %p443
      %p445 = scmp.ne.s32.totalorder %s437, %s439
      %p446 = scmp.eq.s32.totalorder %s46, 1
      %p447 = por %p445, %p446
      %p448 = scmp.ne.s32.totalorder %s439, %s440
      %p449 = scmp.eq.s32.totalorder %s46, 0
      %p450 = por %p448, %p449
      %p451 = scmp.ne.s32.totalorder %s439, %s440
      %p452 = scmp.eq.s32.totalorder %s47, 1
      %p453 = por %p451, %p452
      %p455 = scmp.ne.s32.totalorder %s440, %s454
      %p456 = scmp.eq.s32.totalorder %s47, 0
      %p457 = por %p455, %p456
      %s459 = sadd.s32 %s458, 1
      %p462 = scmp.eq.s32.totalorder %s41, 1
      %p463 = scmp.ne.s32.totalorder %s458, %s460
      %p464 = scmp.eq.s32.totalorder %s41, 0
      %p465 = por %p463, %p464
      %p466 = scmp.ne.s32.totalorder %s458, %s460
      %p467 = scmp.eq.s32.totalorder %s46, 1
      %p468 = por %p466, %p467
      %p469 = scmp.ne.s32.totalorder %s460, %s461
      %p470 = scmp.eq.s32.totalorder %s46, 0
      %p471 = por %p469, %p470
      %p472 = scmp.ne.s32.totalorder %s460, %s461
      %p473 = scmp.eq.s32.totalorder %s47, 1
      %p474 = por %p472, %p473
      %p476 = scmp.ne.s32.totalorder %s461, %s475
      %p477 = scmp.eq.s32.totalorder %s47, 0
      %p478 = por %p476, %p477
      %s479 = ssub.s32 %s48, %s60
      %s480 = ssub.s32 %s49, %s56
      %s481 = sor.u32 %s479, %s480
      %p482 = scmp.eq.s32.totalorder %s481, 0
      %s484 = sadd.s32 %s483, 1
      %s485 = scalar_select %p482, %s483, %s484
      %p488 = pneg %p482
      %p489 = scmp.eq.s32.totalorder %s41, 1
      %p490 = por %p488, %p489
      %p491 = scmp.ne.s32.totalorder %s483, %s486
      %p492 = scmp.eq.s32.totalorder %s41, 0
      %p493 = por %p491, %p492
      %p494 = scmp.ne.s32.totalorder %s483, %s486
      %p495 = scmp.eq.s32.totalorder %s46, 1
      %p496 = por %p494, %p495
      %p497 = scmp.ne.s32.totalorder %s486, %s487
      %p498 = scmp.eq.s32.totalorder %s46, 0
      %p499 = por %p497, %p498
      %p500 = scmp.ne.s32.totalorder %s486, %s487
      %p501 = scmp.eq.s32.totalorder %s47, 1
      %p502 = por %p500, %p501
      %p504 = scmp.ne.s32.totalorder %s487, %s503
      %p505 = scmp.eq.s32.totalorder %s47, 0
      %p506 = por %p504, %p505
      %s507 = ssub.s32 %s48, %s60
      %s508 = ssub.s32 %s49, %s56
      %s509 = sor.u32 %s507, %s508
      %p510 = scmp.eq.s32.totalorder %s509, 0
      %s512 = sadd.s32 %s511, 1
      %s513 = scalar_select %p510, %s511, %s512
      %p516 = pneg %p510
      %p517 = scmp.eq.s32.totalorder %s41, 1
      %p518 = por %p516, %p517
      %p519 = scmp.ne.s32.totalorder %s511, %s514
      %p520 = scmp.eq.s32.totalorder %s41, 0
      %p521 = por %p519, %p520
      %p522 = scmp.ne.s32.totalorder %s511, %s514
      %p523 = scmp.eq.s32.totalorder %s46, 1
      %p524 = por %p522, %p523
      %p525 = scmp.ne.s32.totalorder %s514, %s515
      %p526 = scmp.eq.s32.totalorder %s46, 0
      %p527 = por %p525, %p526
      %p528 = scmp.ne.s32.totalorder %s514, %s515
      %p529 = scmp.eq.s32.totalorder %s47, 1
      %p530 = por %p528, %p529
      %p532 = scmp.ne.s32.totalorder %s515, %s531
      %p533 = scmp.eq.s32.totalorder %s47, 0
      %p534 = por %p532, %p533
      %p535 = scmp.le.s32.totalorder 1, %s41
      %p536 = scmp.lt.s32.totalorder %s41, 3
      %p537 = pnand %p535, %p536
      %p538 = pneg %p537
      // Predicated region
      $region9: #{tpu_custom_call.1} parent=5 // pred_check
        _
      $region10: #{tpu_custom_call.1} parent=5 // pred_check_branch
        %540 = sbr.rel (%p537) target = $region12
      $region11: #{tpu_custom_call.1} parent=5 // pred_region
        %s541 = ssub.s32 %s41, 1
        // Predicated region
        $region13: #{tpu_custom_call.1} parent=11 // pred_check
          %p542 = pneg %p156
        $region14: #{tpu_custom_call.1} parent=11 // pred_check_branch
          %544 = sbr.rel (%p542) target = $region16
        $region15: #{tpu_custom_call.1} parent=11 // pred_region
          _
        $region16: #{tpu_custom_call.1} parent=11 // pred_fallthru
          _
        // Predicated region
        $region17: #{tpu_custom_call.1} parent=11 // pred_check
          %p545 = pneg %p177
        $region18: #{tpu_custom_call.1} parent=11 // pred_check_branch
          %547 = sbr.rel (%p545) target = $region20
        $region19: #{tpu_custom_call.1} parent=11 // pred_region
          %549 = vsyncadd [#allocation8], 0
          %s551 = sshll.u32 %s4, 4
          %s552 = int_to_ptr.hbm [resolvable:$true] %s551
          %s553 = sshll.u32 [#allocation7], 4
          %s554 = int_to_ptr.vmem [resolvable:$true] %s553
          %556 = dma.hbm_to_vmem [thread:$0]  %s552, 16, %s554, [#allocation8]
        $region20: #{tpu_custom_call.1} parent=11 // pred_fallthru
          _
        // Predicated region
        $region21: #{tpu_custom_call.1} parent=11 // pred_check
          %p557 = pneg %p198
        $region22: #{tpu_custom_call.1} parent=11 // pred_check_branch
          %559 = sbr.rel (%p557) target = $region24
        $region23: #{tpu_custom_call.1} parent=11 // pred_region
          _
        $region24: #{tpu_custom_call.1} parent=11 // pred_fallthru
          _
        // Predicated region
        $region25: #{tpu_custom_call.1} parent=11 // pred_check
          %p560 = pneg %p219
        $region26: #{tpu_custom_call.1} parent=11 // pred_check_branch
          %562 = sbr.rel (%p560) target = $region28
        $region27: #{tpu_custom_call.1} parent=11 // pred_region
          %564 = vsyncadd [#allocation8], 0
          %s566 = sshll.u32 %s6, 4
          %s567 = int_to_ptr.hbm [resolvable:$true] %s566
          %s568 = sshll.u32 [#allocation9], 4
          %s569 = int_to_ptr.vmem [resolvable:$true] %s568
          %571 = dma.hbm_to_vmem [thread:$0]  %s567, 16, %s569, [#allocation8]
        $region28: #{tpu_custom_call.1} parent=11 // pred_fallthru
          _
        // Predicated region
        $region29: #{tpu_custom_call.1} parent=11 // pred_check
          %p572 = pneg %p240
        $region30: #{tpu_custom_call.1} parent=11 // pred_check_branch
          %574 = sbr.rel (%p572) target = $region32
        $region31: #{tpu_custom_call.1} parent=11 // pred_region
          _
        $region32: #{tpu_custom_call.1} parent=11 // pred_fallthru
          _
        // Predicated region
        $region33: #{tpu_custom_call.1} parent=11 // pred_check
          %p575 = pneg %p261
        $region34: #{tpu_custom_call.1} parent=11 // pred_check_branch
          %577 = sbr.rel (%p575) target = $region36
        $region35: #{tpu_custom_call.1} parent=11 // pred_region
          %579 = vsyncadd [#allocation11], 0
          %s581 = sshll.u32 %s8, 4
          %s582 = int_to_ptr.hbm [resolvable:$true] %s581
          %s583 = sshll.u32 [#allocation10], 4
          %s584 = int_to_ptr.vmem [resolvable:$true] %s583
          %586 = dma.hbm_to_vmem [thread:$0]  %s582, 16, %s584, [#allocation11]
        $region36: #{tpu_custom_call.1} parent=11 // pred_fallthru
          _
        // Predicated region
        $region37: #{tpu_custom_call.1} parent=11 // pred_check
          %p587 = pneg %p282
        $region38: #{tpu_custom_call.1} parent=11 // pred_check_branch
          %589 = sbr.rel (%p587) target = $region40
        $region39: #{tpu_custom_call.1} parent=11 // pred_region
          %591 = vsyncadd [#allocation11], 0
          %s592 = sshll.u32 %s9, 4
          %s593 = int_to_ptr.hbm [resolvable:$true] %s592
          %s594 = sshll.u32 [#allocation12], 4
          %s595 = int_to_ptr.vmem [resolvable:$true] %s594
          %600 = dma.hbm_to_vmem [thread:$0]  %s593, 256, %s595, [#allocation11], 64, 64, 4
        $region40: #{tpu_custom_call.1} parent=11 // pred_fallthru
          _
        // Predicated region
        $region41: #{tpu_custom_call.1} parent=11 // pred_check
          %p601 = pneg %p303
        $region42: #{tpu_custom_call.1} parent=11 // pred_check_branch
          %603 = sbr.rel (%p601) target = $region44
        $region43: #{tpu_custom_call.1} parent=11 // pred_region
          %605 = vsyncadd [#allocation14], 0
          %s607 = sshll.u32 %s10, 4
          %s608 = int_to_ptr.hbm [resolvable:$true] %s607
          %s609 = sshll.u32 [#allocation13], 4
          %s610 = int_to_ptr.vmem [resolvable:$true] %s609
          %612 = dma.hbm_to_vmem [thread:$0]  %s608, 16, %s610, [#allocation14]
        $region44: #{tpu_custom_call.1} parent=11 // pred_fallthru
          _
        // Predicated region
        $region45: #{tpu_custom_call.1} parent=11 // pred_check
          %p613 = pneg %p324
        $region46: #{tpu_custom_call.1} parent=11 // pred_check_branch
          %615 = sbr.rel (%p613) target = $region48
        $region47: #{tpu_custom_call.1} parent=11 // pred_region
          %617 = vsyncadd [#allocation14], 0
          %s619 = sshll.u32 %s11, 4
          %s620 = int_to_ptr.hbm [resolvable:$true] %s619
          %s621 = sshll.u32 [#allocation15], 4
          %s622 = int_to_ptr.vmem [resolvable:$true] %s621
          %624 = dma.hbm_to_vmem [thread:$0]  %s620, 16, %s622, [#allocation14]
        $region48: #{tpu_custom_call.1} parent=11 // pred_fallthru
          _
        // Predicated region
        $region49: #{tpu_custom_call.1} parent=11 // pred_check
          %p625 = pneg %p345
        $region50: #{tpu_custom_call.1} parent=11 // pred_check_branch
          %627 = sbr.rel (%p625) target = $region52
        $region51: #{tpu_custom_call.1} parent=11 // pred_region
          %629 = vsyncadd [#allocation17], 0
          %s631 = sshll.u32 %s12, 4
          %s632 = int_to_ptr.hbm [resolvable:$true] %s631
          %s633 = sshll.u32 [#allocation16], 4
          %s634 = int_to_ptr.vmem [resolvable:$true] %s633
          %636 = dma.hbm_to_vmem [thread:$0]  %s632, 16, %s634, [#allocation17]
        $region52: #{tpu_custom_call.1} parent=11 // pred_fallthru
          _
        // Predicated region
        $region53: #{tpu_custom_call.1} parent=11 // pred_check
          %p637 = pneg %p366
        $region54: #{tpu_custom_call.1} parent=11 // pred_check_branch
          %639 = sbr.rel (%p637) target = $region56
        $region55: #{tpu_custom_call.1} parent=11 // pred_region
          %641 = vsyncadd [#allocation17], 0
          %s642 = sshll.u32 %s13, 4
          %s643 = int_to_ptr.hbm [resolvable:$true] %s642
          %s644 = sshll.u32 [#allocation18], 4
          %s645 = int_to_ptr.vmem [resolvable:$true] %s644
          %650 = dma.hbm_to_vmem [thread:$0]  %s643, 256, %s645, [#allocation17], 64, 64, 4
        $region56: #{tpu_custom_call.1} parent=11 // pred_fallthru
          _
        // Predicated region
        $region57: #{tpu_custom_call.1} parent=11 // pred_check
          %p651 = pneg %p387
        $region58: #{tpu_custom_call.1} parent=11 // pred_check_branch
          %653 = sbr.rel (%p651) target = $region60
        $region59: #{tpu_custom_call.1} parent=11 // pred_region
          %655 = vsyncadd [#allocation20], 0
          %s657 = sshll.u32 %s14, 4
          %s658 = int_to_ptr.hbm [resolvable:$true] %s657
          %s659 = sshll.u32 [#allocation19], 4
          %s660 = int_to_ptr.vmem [resolvable:$true] %s659
          %662 = dma.hbm_to_vmem [thread:$0]  %s658, 16, %s660, [#allocation20]
        $region60: #{tpu_custom_call.1} parent=11 // pred_fallthru
          _
        // Predicated region
        $region61: #{tpu_custom_call.1} parent=11 // pred_check
          %p663 = pneg %p408
        $region62: #{tpu_custom_call.1} parent=11 // pred_check_branch
          %665 = sbr.rel (%p663) target = $region64
        $region63: #{tpu_custom_call.1} parent=11 // pred_region
          _
        $region64: #{tpu_custom_call.1} parent=11 // pred_fallthru
          _
        // Predicated region
        $region65: #{tpu_custom_call.1} parent=11 // pred_check
          %p666 = pneg %p429
        $region66: #{tpu_custom_call.1} parent=11 // pred_check_branch
          %668 = sbr.rel (%p666) target = $region68
        $region67: #{tpu_custom_call.1} parent=11 // pred_region
          _
        $region68: #{tpu_custom_call.1} parent=11 // pred_fallthru
          _
        // Predicated region
        $region69: #{tpu_custom_call.1} parent=11 // pred_check
          %p669 = pneg %p450
        $region70: #{tpu_custom_call.1} parent=11 // pred_check_branch
          %671 = sbr.rel (%p669) target = $region72
        $region71: #{tpu_custom_call.1} parent=11 // pred_region
          _
        $region72: #{tpu_custom_call.1} parent=11 // pred_fallthru
          _
        // Predicated region
        $region73: #{tpu_custom_call.1} parent=11 // pred_check
          %p672 = pneg %p471
        $region74: #{tpu_custom_call.1} parent=11 // pred_check_branch
          %674 = sbr.rel (%p672) target = $region76
        $region75: #{tpu_custom_call.1} parent=11 // pred_region
          _
        $region76: #{tpu_custom_call.1} parent=11 // pred_fallthru
          _
      $region12: #{tpu_custom_call.1} parent=5 // pred_fallthru
        _
      %p675 = scmp.lt.s32.totalorder %s41, 2
      // Predicated region
      $region77: #{tpu_custom_call.1} parent=5 // pred_check
        %p676 = pneg %p675
      $region78: #{tpu_custom_call.1} parent=5 // pred_check_branch
        %678 = sbr.rel (%p676) target = $region80
      $region79: #{tpu_custom_call.1} parent=5 // pred_region
        // Predicated region
        $region81: #{tpu_custom_call.1} parent=79 // pred_check
          %p679 = pneg %p73
        $region82: #{tpu_custom_call.1} parent=79 // pred_check_branch
          %681 = sbr.rel (%p679) target = $region84
        $region83: #{tpu_custom_call.1} parent=79 // pred_region
          %p682 = scmp.lt.s32.totalorder %s48, 1
          %s683 = scalar_select %p682, %s48, 1
          %s684 = smul.addr %s683, 8
          %s685 = scalar_lea.vmem %s0, %s684
        $region84: #{tpu_custom_call.1} parent=79 // pred_fallthru
          _
        // Predicated region
        $region85: #{tpu_custom_call.1} parent=79 // pred_check
          %p686 = pneg %p101
        $region86: #{tpu_custom_call.1} parent=79 // pred_check_branch
          %688 = sbr.rel (%p686) target = $region88
        $region87: #{tpu_custom_call.1} parent=79 // pred_region
          %p689 = scmp.lt.s32.totalorder %s48, 1
          %s690 = scalar_select %p689, %s48, 1
          %p691 = scmp.lt.s32.totalorder %s49, 0
          %s692 = scalar_select %p691, %s49, 0
          %s693 = sadd.s32 %s692, %s690
          %s694 = smul.addr %s693, 8
          %s695 = scalar_lea.vmem %s1, %s694
        $region88: #{tpu_custom_call.1} parent=79 // pred_fallthru
          _
        // Predicated region
        $region89: #{tpu_custom_call.1} parent=79 // pred_check
          %p696 = pneg %p129
        $region90: #{tpu_custom_call.1} parent=79 // pred_check_branch
          %698 = sbr.rel (%p696) target = $region92
        $region91: #{tpu_custom_call.1} parent=79 // pred_region
          %s699 = sand.u32 %s119, 1
          %s700 = scalar_lea.sflag [#allocation5], %s699
          %s701 = sand.u32 %s119, 1
          %s702 = smul.addr %s701, 2
          %s703 = scalar_lea.vmem [#allocation4], %s702
          %705 = vsyncadd %s700, 0
          %s706 = sadd.s32 %s49, %s48
          %s707 = smul.addr %s706, 2
          %s708 = scalar_lea.hbm %s2, %s707
          %s710 = sshll.u32 %s708, 4
          %s711 = int_to_ptr.hbm [resolvable:$true] %s710
          %s712 = sshll.u32 %s703, 4
          %s713 = int_to_ptr.vmem [resolvable:$true] %s712
          %715 = dma.hbm_to_vmem [thread:$0]  %s711, 32, %s713, %s700
        $region92: #{tpu_custom_call.1} parent=79 // pred_fallthru
          _
      $region80: #{tpu_custom_call.1} parent=5 // pred_fallthru
        _
      %p716 = scmp.le.s32.totalorder 1, %s41
      %p717 = scmp.lt.s32.totalorder %s41, 3
      %p718 = pnand %p716, %p717
      %p719 = pneg %p718
      // Predicated region
      $region93: #{tpu_custom_call.1} parent=5 // pred_check
        _
      $region94: #{tpu_custom_call.1} parent=5 // pred_check_branch
        %721 = sbr.rel (%p718) target = $region96
      $region95: #{tpu_custom_call.1} parent=5 // pred_region
        %s722 = ssub.s32 %s41, 1
        %s723 = sand.u32 %s122, 1
        %s724 = scalar_lea.sflag [#allocation5], %s723
        %s725 = sand.u32 %s122, 1
        %s726 = smul.addr %s725, 2
        %s727 = scalar_lea.vmem [#allocation4], %s726
        // Predicated region
        $region97: #{tpu_custom_call.1} parent=95 // pred_check
          %p728 = pneg %p135
        $region98: #{tpu_custom_call.1} parent=95 // pred_check_branch
          %730 = sbr.rel (%p728) target = $region100
        $region99: #{tpu_custom_call.1} parent=95 // pred_region
          %732 = dma.done %s724, 32
        $region100: #{tpu_custom_call.1} parent=95 // pred_fallthru
          _
        // Predicated region
        $region101: #{tpu_custom_call.1} parent=95 // pred_check
          %p733 = pneg %p177
        $region102: #{tpu_custom_call.1} parent=95 // pred_check_branch
          %735 = sbr.rel (%p733) target = $region104
        $region103: #{tpu_custom_call.1} parent=95 // pred_region
          %737 = dma.done [#allocation8], 16
        $region104: #{tpu_custom_call.1} parent=95 // pred_fallthru
          _
        // Predicated region
        $region105: #{tpu_custom_call.1} parent=95 // pred_check
          %p738 = pneg %p219
        $region106: #{tpu_custom_call.1} parent=95 // pred_check_branch
          %740 = sbr.rel (%p738) target = $region108
        $region107: #{tpu_custom_call.1} parent=95 // pred_region
          %742 = dma.done [#allocation8], 16
        $region108: #{tpu_custom_call.1} parent=95 // pred_fallthru
          _
        // Predicated region
        $region109: #{tpu_custom_call.1} parent=95 // pred_check
          %p743 = pneg %p261
        $region110: #{tpu_custom_call.1} parent=95 // pred_check_branch
          %745 = sbr.rel (%p743) target = $region112
        $region111: #{tpu_custom_call.1} parent=95 // pred_region
          %747 = dma.done [#allocation11], 16
        $region112: #{tpu_custom_call.1} parent=95 // pred_fallthru
          _
        // Predicated region
        $region113: #{tpu_custom_call.1} parent=95 // pred_check
          %p748 = pneg %p282
        $region114: #{tpu_custom_call.1} parent=95 // pred_check_branch
          %750 = sbr.rel (%p748) target = $region116
        $region115: #{tpu_custom_call.1} parent=95 // pred_region
          %752 = dma.done [#allocation11], 256
        $region116: #{tpu_custom_call.1} parent=95 // pred_fallthru
          _
        // Predicated region
        $region117: #{tpu_custom_call.1} parent=95 // pred_check
          %p753 = pneg %p303
        $region118: #{tpu_custom_call.1} parent=95 // pred_check_branch
          %755 = sbr.rel (%p753) target = $region120
        $region119: #{tpu_custom_call.1} parent=95 // pred_region
          %757 = dma.done [#allocation14], 16
        $region120: #{tpu_custom_call.1} parent=95 // pred_fallthru
          _
        // Predicated region
        $region121: #{tpu_custom_call.1} parent=95 // pred_check
          %p758 = pneg %p324
        $region122: #{tpu_custom_call.1} parent=95 // pred_check_branch
          %760 = sbr.rel (%p758) target = $region124
        $region123: #{tpu_custom_call.1} parent=95 // pred_region
          %762 = dma.done [#allocation14], 16
        $region124: #{tpu_custom_call.1} parent=95 // pred_fallthru
          _
        // Predicated region
        $region125: #{tpu_custom_call.1} parent=95 // pred_check
          %p763 = pneg %p345
        $region126: #{tpu_custom_call.1} parent=95 // pred_check_branch
          %765 = sbr.rel (%p763) target = $region128
        $region127: #{tpu_custom_call.1} parent=95 // pred_region
          %767 = dma.done [#allocation17], 16
        $region128: #{tpu_custom_call.1} parent=95 // pred_fallthru
          _
        // Predicated region
        $region129: #{tpu_custom_call.1} parent=95 // pred_check
          %p768 = pneg %p366
        $region130: #{tpu_custom_call.1} parent=95 // pred_check_branch
          %770 = sbr.rel (%p768) target = $region132
        $region131: #{tpu_custom_call.1} parent=95 // pred_region
          %772 = dma.done [#allocation17], 256
        $region132: #{tpu_custom_call.1} parent=95 // pred_fallthru
          _
        // Predicated region
        $region133: #{tpu_custom_call.1} parent=95 // pred_check
          %p773 = pneg %p387
        $region134: #{tpu_custom_call.1} parent=95 // pred_check_branch
          %775 = sbr.rel (%p773) target = $region136
        $region135: #{tpu_custom_call.1} parent=95 // pred_region
          %777 = dma.done [#allocation20], 16
        $region136: #{tpu_custom_call.1} parent=95 // pred_fallthru
          _
        %p778 = scmp.lt.s32.totalorder %s50, 1
        %s779 = scalar_select %p778, %s50, 1
        %s780 = smul.addr %s779, 8
        %s781 = scalar_lea.vmem %s0, %s780
        %p782 = pneg %p79
        %p783 = pneg %p76
        %p784 = scmp.lt.s32.totalorder %s50, 1
        %s785 = scalar_select %p784, %s50, 1
        %p786 = scmp.lt.s32.totalorder %s51, 0
        %s787 = scalar_select %p786, %s51, 0
        %s788 = sadd.s32 %s787, %s785
        %s789 = smul.addr %s788, 8
        %s790 = scalar_lea.vmem %s1, %s789
        %p791 = pneg %p107
        %p792 = pneg %p104
        %s793 = sand.u32 %s122, 1
        %s794 = scalar_lea.sflag [#allocation5], %s793
        %s795 = sand.u32 %s122, 1
        %s796 = smul.addr %s795, 2
        %s797 = scalar_lea.vmem [#allocation4], %s796
        %p798 = pneg %p135
        %p799 = pneg %p132
        %p800 = pneg %p156
        %p801 = pneg %p153
        %p802 = pneg %p177
        %p803 = pneg %p174
        %p804 = pneg %p198
        %p805 = pneg %p195
        %p806 = pneg %p219
        %p807 = pneg %p216
        %p808 = pneg %p240
        %p809 = pneg %p237
        %p810 = pneg %p261
        %p811 = pneg %p258
        %p812 = pneg %p282
        %p813 = pneg %p279
        %p814 = pneg %p303
        %p815 = pneg %p300
        %p816 = pneg %p324
        %p817 = pneg %p321
        %p818 = pneg %p345
        %p819 = pneg %p342
        %p820 = pneg %p366
        %p821 = pneg %p363
        %p822 = pneg %p387
        %p823 = pneg %p384
        %p824 = pneg %p408
        %p825 = pneg %p405
        %p826 = pneg %p429
        %p827 = pneg %p426
        %p828 = pneg %p450
        %p829 = pneg %p447
        %p830 = pneg %p471
        %p831 = pneg %p468
        %p832 = pneg %p499
        %p833 = pneg %p496
        %s834 = sand.u32 %s486, 1
        %s835 = scalar_lea.sflag [#allocation6], %s834
        %s836 = sand.u32 %s486, 1
        %s837 = smul.addr %s836, 8
        %s838 = scalar_lea.vmem [#allocation21], %s837
        %p839 = pneg %p527
        %p840 = pneg %p524
        %s841 = sand.u32 %s514, 1
        %s842 = scalar_lea.sflag [#allocation23], %s841
        %s843 = sand.u32 %s514, 1
        %s844 = smul.addr %s843, 8
        %s845 = scalar_lea.vmem [#allocation22], %s844
        %p846 = scmp.lt.s32.totalorder %s50, 1
        %s847 = scalar_select %p846, %s50, 1
        %s848 = smul.addr %s847, 8
        %s849 = scalar_lea.vmem %s0, %s848
        %p850 = scmp.lt.s32.totalorder %s50, 1
        %s851 = scalar_select %p850, %s50, 1
        %p852 = scmp.lt.s32.totalorder %s51, 0
        %s853 = scalar_select %p852, %s51, 0
        %s854 = sadd.s32 %s853, %s851
        %s855 = smul.addr %s854, 8
        %s856 = scalar_lea.vmem %s1, %s855
        %p860 = scmp.eq.s32.totalorder %s51, 0
        // Predicated region
        $region137: #{tpu_custom_call.1} parent=95 // pred_check
          %p861 = pneg %p860
        $region138: #{tpu_custom_call.1} parent=95 // pred_check_branch
          %863 = sbr.rel (%p861) target = $region140
        $region139: #{tpu_custom_call.1} parent=95 // pred_region
          %v864 = vld [vmem:[%s849] sm:$0xff]
          %v865 = vpack.c.bf16 %v864, %v864
          %v866 = vld [vmem:[%s5] sm:$0xf]
          %v867 = vld [vmem:[%s5 + $0x4] sm:$0xf]
          %v868 = vld [vmem:[%s5 + $0x8] sm:$0xf]
          %v869 = vld [vmem:[%s5 + $0xc] sm:$0xf]
          %v870 = vld [vmem:[#allocation9] sm:$0x1]
          %v872 = vperm.slane %v870, 0
          %v878 = vunpack.c.l.b16 %v866
          %v879 = vunpack.c.l.b16 %v867
          %v880 = vunpack.c.l.b16 %v868
          %v881 = vunpack.c.l.b16 %v869
          %v882 = vpack.c.b16 %v879, %v878
          %v883 = vpack.c.b16 %v881, %v880
          %vm886 = vcmask 261120
          %v888 = vsel %vm886, %v865, 0
          %890 = vmatpush.bf16.msra.mxu0 0
          %891 = vmatpush.bf16.msra.mxu0 0
          %892 = vmatpush.bf16.msra.mxu0 0
          %893 = vmatpush.bf16.msra.mxu0 0
          %894 = vmatpush.bf16.msra.mxu0 0
          %895 = vmatpush.bf16.msra.mxu0 0
          %896 = vmatpush.bf16.msra.mxu0 %v883
          %897 = vmatpush.bf16.msra.mxu0 %v882
          %898 = vmatmul.bf16.gmra.mxu0 %v888
          %v899 = vpop.f32.mrf.mxu0
          %v900 = vadd.f32 %v872, %v899
          %v901 = vpop.f32.mrf.mxu0
          %902 = vdwg.mxu0
          %v903 = vpack.c.bf16 %v900, %v900
          %vm904 = vcmask 257024
          %905 = vst.msk [vmem:[#allocation2] sm:$0xf] %vm904, %v903
          %v906 = vld [vmem:[%s7] sm:$0xf]
          %v907 = vld [vmem:[%s7 + $0x4] sm:$0xf]
          %v908 = vld [vmem:[%s7 + $0x8] sm:$0xf]
          %v909 = vld [vmem:[%s7 + $0xc] sm:$0xf]
          %v910 = vld [vmem:[#allocation10] sm:$0x1]
          %v912 = vperm.slane %v910, 0
          %v918 = vunpack.c.l.b16 %v906
          %v919 = vunpack.c.l.b16 %v907
          %v920 = vunpack.c.l.b16 %v908
          %v921 = vunpack.c.l.b16 %v909
          %v922 = vpack.c.b16 %v919, %v918
          %v923 = vpack.c.b16 %v921, %v920
          %926 = vmatpush.bf16.msra.mxu0 0
          %927 = vmatpush.bf16.msra.mxu0 0
          %928 = vmatpush.bf16.msra.mxu0 0
          %929 = vmatpush.bf16.msra.mxu0 0
          %930 = vmatpush.bf16.msra.mxu0 0
          %931 = vmatpush.bf16.msra.mxu0 0
          %932 = vmatpush.bf16.msra.mxu0 %v923
          %933 = vmatpush.bf16.msra.mxu0 %v922
          %934 = vmatmul.bf16.gmra.mxu0 %v888
          %v935 = vpop.f32.mrf.mxu0
          %v936 = vadd.f32 %v912, %v935
          %v937 = vpop.f32.mrf.mxu0
          %938 = vdwg.mxu0
          %v939 = vpack.c.bf16 %v936, %v936
          %940 = vst.msk [vmem:[#allocation3] sm:$0xf] %vm904, %v939
        $region140: #{tpu_custom_call.1} parent=95 // pred_fallthru
          _
        %s941 = smul.u32 %s51, 8
        %s942 = scalar_lea.vmem %s849, %s941
        %v943 = vld [vmem:[%s942] sm:$0xff]
        %v944 = vpack.c.bf16 %v943, %v943
        %v945 = vld [vmem:[%s856] sm:$0xff]
        %v946 = vld [vmem:[%s727] sm:$0x3]
        %v947 = vld [vmem:[%s3] sm:$0xf]
        %v948 = vld [vmem:[%s3 + $0x4] sm:$0xf]
        %v949 = vld [vmem:[%s3 + $0x8] sm:$0xf]
        %v950 = vld [vmem:[%s3 + $0xc] sm:$0xf]
        %v951 = vld [vmem:[#allocation7] sm:$0x1]
        %v953 = vperm.slane %v951, 0
        %v959 = vunpack.c.l.b16 %v947
        %v960 = vunpack.c.l.b16 %v948
        %v961 = vunpack.c.l.b16 %v949
        %v962 = vunpack.c.l.b16 %v950
        %v963 = vpack.c.b16 %v960, %v959
        %v964 = vpack.c.b16 %v962, %v961
        %vm967 = vcmask 261120
        %v969 = vsel %vm967, %v944, 0
        %971 = vmatpush.bf16.msra.mxu0 0
        %972 = vmatpush.bf16.msra.mxu0 0
        %973 = vmatpush.bf16.msra.mxu0 0
        %974 = vmatpush.bf16.msra.mxu0 0
        %975 = vmatpush.bf16.msra.mxu0 0
        %976 = vmatpush.bf16.msra.mxu0 0
        %977 = vmatpush.bf16.msra.mxu0 %v964
        %978 = vmatpush.bf16.msra.mxu0 %v963
        %979 = vmatmul.bf16.gmra.mxu0 %v969
        %v980 = vpop.f32.mrf.mxu0
        %v981 = vadd.f32 %v953, %v980
        %v982 = vpop.f32.mrf.mxu0
        %983 = vdwg.mxu0
        %v984 = vpack.c.bf16 %v981, %v981
        %v985 = vld [vmem:[#allocation2] sm:$0xf]
        %v986 = vld [vmem:[#allocation3] sm:$0xf]
        %vm987 = vcmask 130048
        %v989 = vsel %vm987, %v984, 0
        %v992 = vsel %vm987, %v985, 0
        %994 = vmatpush.bf16.xpose.msra.mxu0 0
        %995 = vmatpush.bf16.xpose.msra.mxu0 0
        %996 = vmatpush.bf16.xpose.msra.mxu0 0
        %997 = vmatpush.bf16.xpose.msra.mxu0 0
        %998 = vmatpush.bf16.xpose.msra.mxu0 0
        %999 = vmatpush.bf16.xpose.msra.mxu0 0
        %1000 = vmatpush.bf16.xpose.msra.mxu0 0
        %1001 = vmatpush.bf16.xpose.msra.mxu0 %v992
        %1002 = vmatmul.bf16.gmra.mxu0 %v989
        %v1003 = vpop.f32.mrf.mxu0
        %v1004 = vadd.f32 0.0, %v1003
        %v1005 = vpop.f32.mrf.mxu0
        %1006 = vdwg.mxu0
        %vm1007 = vnez %v946
        %v1008 = vsel %vm1007, 16843009, 0
        %v1009 = vunpack.c.0.s8 %v1008
        %vm1010 = vcmp.ne.s32.totalorder %v1009, 0
        %v1011 = vsel %vm1010, -1e+30, %v1004
        %vm1012 = vcmask 64512
        %v1013 = vsel %vm1012, %v1011, -inf
        %1014 = vmax.xlane.f32.xlu0 %v1013
        %v1015 = vpop.xlane.xlu0 %1014
        %v1016 = vsub.f32 %v1011, %v1015
        %v1017 = vmul.f32 %v1016, 1.442695
        %v1018 = vpow.pop %v1017
        %v1019 = vsel %vm1012, %v1018, 0.0
        %1020 = vadd.xlane.f32.xlu0 %v1019
        %v1021 = vpop.xlane.xlu0 %1020
        %v1022 = vrcp.pop %v1021
        %v1023 = vmul.f32 %v1021, %v1022
        %v1024 = vsub.f32 1.0, %v1023
        %v1025 = vmul.f32 %v1022, %v1024
        %v1026 = vadd.f32 %v1022, %v1025
        %vm1027 = vweird.f32 %v1021
        %vm1028 = vweird.f32 %v1022
        %vm1029 = vmor %vm1027, %vm1028
        %v1030 = vsel %vm1029, %v1022, %v1026
        %v1031 = vand.u32 2147483647, %v1021
        %vm1032 = vcmp.eq.f32.partialorder %v1031, 8.507059e+37
        %v1033 = vand.u32 %v1021, 2147483648
        %v1034 = vor.u32 1.1754944e-38, %v1033
        %v1035 = vsel %vm1032, %v1034, %v1030
        %v1036 = vmul.f32 %v1018, %v1035
        %v1037 = vpack.c.bf16 %v1036, %v1036
        %vm1038 = vcmask 60416
        %1039 = vst.msk [vmem:[%s845] sm:$0xf] %vm1038, %v1037
        %v1041 = vsel %vm1012, %v1037, 0
        %vm1043 = vcmask 1043456
        %v1045 = vsel %vm1043, %v986, 0
        %1047 = vmatpush.bf16.msra.mxu0 0
        %1048 = vmatpush.bf16.msra.mxu0 0
        %1049 = vmatpush.bf16.msra.mxu0 0
        %1050 = vmatpush.bf16.msra.mxu0 0
        %1051 = vmatpush.bf16.msra.mxu0 0
        %1052 = vmatpush.bf16.msra.mxu0 0
        %1053 = vmatpush.bf16.msra.mxu0 0
        %1054 = vmatpush.bf16.msra.mxu0 %v1045
        %1055 = vmatmul.bf16.gmra.mxu0 %v1041
        %v1056 = vpop.f32.mrf.mxu0
        %v1057 = vadd.f32 0.0, %v1056
        %v1058 = vpop.f32.mrf.mxu0
        %1059 = vdwg.mxu0
        %v1060 = vpack.c.bf16 %v1057, %v1057
        %v1061 = vld [vmem:[#allocation2] sm:$0xf]
        %v1062 = vld [vmem:[#allocation3] sm:$0xf]
        %v1064 = vunpack.c.l.b16 %v984
        %v1065 = vpack.c.b16 %v1064, %v1064
        %1066 = vrot.lane.b32.xlu0 %v1065, 112
        %v1067 = vpop.permute.xlu0 %1066
        %v1069 = vunpack.c.l.b16 %v1061
        %v1070 = vpack.c.b16 %v1069, %v1069
        %1071 = vrot.lane.b32.xlu0 %v1070, 112
        %v1072 = vpop.permute.xlu0 %1071
        %v1074 = vsel %vm987, %v1067, 0
        %v1077 = vsel %vm987, %v1072, 0
        %1079 = vmatpush.bf16.xpose.msra.mxu0 0
        %1080 = vmatpush.bf16.xpose.msra.mxu0 0
        %1081 = vmatpush.bf16.xpose.msra.mxu0 0
        %1082 = vmatpush.bf16.xpose.msra.mxu0 0
        %1083 = vmatpush.bf16.xpose.msra.mxu0 0
        %1084 = vmatpush.bf16.xpose.msra.mxu0 0
        %1085 = vmatpush.bf16.xpose.msra.mxu0 0
        %1086 = vmatpush.bf16.xpose.msra.mxu0 %v1077
        %1087 = vmatmul.bf16.gmra.mxu0 %v1074
        %v1088 = vpop.f32.mrf.mxu0
        %v1089 = vadd.f32 0.0, %v1088
        %v1090 = vpop.f32.mrf.mxu0
        %1091 = vdwg.mxu0
        %v1092 = vsel %vm1010, -1e+30, %v1089
        %v1093 = vsel %vm1012, %v1092, -inf
        %1094 = vmax.xlane.f32.xlu0 %v1093
        %v1095 = vpop.xlane.xlu0 %1094
        %v1096 = vsub.f32 %v1092, %v1095
        %v1097 = vmul.f32 %v1096, 1.442695
        %v1098 = vpow.pop %v1097
        %v1099 = vsel %vm1012, %v1098, 0.0
        %1100 = vadd.xlane.f32.xlu0 %v1099
        %v1101 = vpop.xlane.xlu0 %1100
        %v1102 = vrcp.pop %v1101
        %v1103 = vmul.f32 %v1101, %v1102
        %v1104 = vsub.f32 1.0, %v1103
        %v1105 = vmul.f32 %v1102, %v1104
        %v1106 = vadd.f32 %v1102, %v1105
        %vm1107 = vweird.f32 %v1101
        %vm1108 = vweird.f32 %v1102
        %vm1109 = vmor %vm1107, %vm1108
        %v1110 = vsel %vm1109, %v1102, %v1106
        %v1111 = vand.u32 2147483647, %v1101
        %vm1112 = vcmp.eq.f32.partialorder %v1111, 8.507059e+37
        %v1113 = vand.u32 %v1101, 2147483648
        %v1114 = vor.u32 1.1754944e-38, %v1113
        %v1115 = vsel %vm1112, %v1114, %v1110
        %v1116 = vmul.f32 %v1098, %v1115
        %v1117 = vpack.c.bf16 %v1116, %v1116
        %s1118 = scalar_lea.vmem %s845, 4 [#allocation22]
        %1119 = vst.msk [vmem:[%s1118] sm:$0xf] %vm1038, %v1117
        %v1121 = vunpack.c.l.b16 %v1062
        %v1122 = vpack.c.b16 %v1121, %v1121
        %1123 = vrot.lane.b32.xlu0 %v1122, 112
        %v1124 = vpop.permute.xlu0 %1123
        %v1126 = vsel %vm1012, %v1117, 0
        %v1129 = vsel %vm1043, %v1124, 0
        %1131 = vmatpush.bf16.msra.mxu0 0
        %1132 = vmatpush.bf16.msra.mxu0 0
        %1133 = vmatpush.bf16.msra.mxu0 0
        %1134 = vmatpush.bf16.msra.mxu0 0
        %1135 = vmatpush.bf16.msra.mxu0 0
        %1136 = vmatpush.bf16.msra.mxu0 0
        %1137 = vmatpush.bf16.msra.mxu0 0
        %1138 = vmatpush.bf16.msra.mxu0 %v1129
        %1139 = vmatmul.bf16.gmra.mxu0 %v1126
        %v1140 = vpop.f32.mrf.mxu0
        %v1141 = vadd.f32 0.0, %v1140
        %v1142 = vpop.f32.mrf.mxu0
        %1143 = vdwg.mxu0
        %v1144 = vpack.c.bf16 %v1141, %v1141
        %v1146 = vunpack.c.l.b16 %v1144
        %v1147 = vpack.c.b16 %v1146, %v1146
        %1148 = vrot.lane.b32.xlu0 %v1147, 16
        %v1149 = vpop.permute.xlu0 %1148
        %v1152 = vsel %vm987, %v1060, %v1149
        %v1153 = vld [vmem:[#allocation12] sm:$0xf]
        %v1154 = vld [vmem:[#allocation12 + $0x4] sm:$0xf]
        %v1155 = vld [vmem:[#allocation12 + $0x8] sm:$0xf]
        %v1156 = vld [vmem:[#allocation12 + $0xc] sm:$0xf]
        %v1157 = vld [vmem:[#allocation13] sm:$0x1]
        %v1159 = vperm.slane %v1157, 0
        %v1165 = vunpack.c.l.b16 %v1153
        %v1166 = vunpack.c.l.b16 %v1154
        %v1167 = vunpack.c.l.b16 %v1155
        %v1168 = vunpack.c.l.b16 %v1156
        %v1169 = vpack.c.b16 %v1166, %v1165
        %v1170 = vpack.c.b16 %v1168, %v1167
        %v1173 = vsel %vm967, %v1152, 0
        %1175 = vmatpush.bf16.msra.mxu0 0
        %1176 = vmatpush.bf16.msra.mxu0 0
        %1177 = vmatpush.bf16.msra.mxu0 0
        %1178 = vmatpush.bf16.msra.mxu0 0
        %1179 = vmatpush.bf16.msra.mxu0 0
        %1180 = vmatpush.bf16.msra.mxu0 0
        %1181 = vmatpush.bf16.msra.mxu0 %v1170
        %1182 = vmatpush.bf16.msra.mxu0 %v1169
        %1183 = vmatmul.bf16.gmra.mxu0 %v1173
        %v1184 = vpop.f32.mrf.mxu0
        %v1185 = vadd.f32 %v1159, %v1184
        %v1186 = vpop.f32.mrf.mxu0
        %1187 = vdwg.mxu0
        %v1188 = vadd.f32 %v1185, %v943
        %v1189 = vsel %vm967, %v1188, 0.0
        %1190 = vadd.xlane.f32.xlu0 %v1189
        %v1191 = vpop.xlane.xlu0 %1190
        %v1192 = vrcp.pop 32.0
        %v1193 = vmul.f32 32.0, %v1192
        %v1194 = vsub.f32 1.0, %v1193
        %v1195 = vmul.f32 %v1192, %v1194
        %v1196 = vadd.f32 %v1192, %v1195
        %vm1197 = vweird.f32 %v1192
        %v1198 = vsel %vm1197, %v1192, %v1196
        %v1199 = vmul.f32 %v1191, %v1198
        %v1200 = vsub.f32 %v1188, %v1199
        %v1201 = vmul.f32 %v1200, %v1200
        %v1202 = vsel %vm967, %v1201, 0.0
        %1203 = vadd.xlane.f32.xlu0 %v1202
        %v1204 = vpop.xlane.xlu0 %1203
        %v1205 = vmul.f32 %v1204, %v1198
        %v1206 = vadd.f32 %v1205, 1e-05
        %v1207 = vrsqrt.pop %v1206
        %v1208 = vmul.f32 %v1207, %v1206
        %v1209 = vmul.f32 %v1208, %v1207
        %v1210 = vmul.f32 0.5, %v1209
        %v1211 = vsub.f32 1.5, %v1210
        %v1212 = vmul.f32 %v1207, %v1211
        %vm1213 = vweird.f32 %v1206
        %vm1214 = vweird.f32 %v1207
        %vm1215 = vmor %vm1213, %vm1214
        %v1216 = vsel %vm1215, %v1207, %v1212
        %v1217 = vmul.f32 %v1200, %v1216
        %v1218 = vld [vmem:[#allocation15] sm:$0x1]
        %v1220 = vperm.slane %v1218, 0
        %v1222 = vmul.f32 %v1217, %v1220
        %v1223 = vld [vmem:[#allocation16] sm:$0x1]
        %v1225 = vperm.slane %v1223, 0
        %v1227 = vadd.f32 %v1222, %v1225
        %1229 = vset.pattern.permute.xlu0 0
        %1230 = vperm.xlu0 %1229, %v945
        %v1231 = vpop.permute.xlu0 %1230
        %v1233 = vmul.f32 %v1227, %v1231
        %v1234 = vpack.c.bf16 %v1233, %v1233
        %v1235 = vld [vmem:[#allocation18] sm:$0xf]
        %v1236 = vld [vmem:[#allocation18 + $0x4] sm:$0xf]
        %v1237 = vld [vmem:[#allocation18 + $0x8] sm:$0xf]
        %v1238 = vld [vmem:[#allocation18 + $0xc] sm:$0xf]
        %v1239 = vld [vmem:[#allocation19] sm:$0x1]
        %v1241 = vperm.slane %v1239, 0
        %v1247 = vunpack.c.l.b16 %v1235
        %v1248 = vunpack.c.l.b16 %v1236
        %v1249 = vunpack.c.l.b16 %v1237
        %v1250 = vunpack.c.l.b16 %v1238
        %v1251 = vpack.c.b16 %v1248, %v1247
        %v1252 = vpack.c.b16 %v1250, %v1249
        %v1256 = vsel %vm967, %v1234, 0
        %1258 = vmatpush.bf16.msra.mxu0 0
        %1259 = vmatpush.bf16.msra.mxu0 0
        %1260 = vmatpush.bf16.msra.mxu0 0
        %1261 = vmatpush.bf16.msra.mxu0 0
        %1262 = vmatpush.bf16.msra.mxu0 0
        %1263 = vmatpush.bf16.msra.mxu0 0
        %1264 = vmatpush.bf16.msra.mxu0 %v1252
        %1265 = vmatpush.bf16.msra.mxu0 %v1251
        %1266 = vmatmul.bf16.gmra.mxu0 %v1256
        %v1267 = vpop.f32.mrf.mxu0
        %v1268 = vadd.f32 %v1241, %v1267
        %v1269 = vpop.f32.mrf.mxu0
        %1270 = vdwg.mxu0
        %v1271 = vmax.f32 %v1268, 0.0
        %v1272 = vpack.c.bf16 %v1271, %v1271
        %v1273 = vld [vmem:[%s15] sm:$0xf]
        %v1274 = vld [vmem:[%s15 + $0x4] sm:$0xf]
        %v1275 = vld [vmem:[%s15 + $0x8] sm:$0xf]
        %v1276 = vld [vmem:[%s15 + $0xc] sm:$0xf]
        %v1277 = vld [vmem:[%s15 + $0x10] sm:$0xf]
        %v1278 = vld [vmem:[%s15 + $0x14] sm:$0xf]
        %v1279 = vld [vmem:[%s15 + $0x18] sm:$0xf]
        %v1280 = vld [vmem:[%s15 + $0x1c] sm:$0xf]
        %v1281 = vld [vmem:[%s16] sm:$0x1]
        %v1283 = vperm.slane %v1281, 0
        %v1293 = vunpack.c.l.b16 %v1273
        %v1294 = vunpack.c.l.b16 %v1274
        %v1295 = vunpack.c.l.b16 %v1275
        %v1296 = vunpack.c.l.b16 %v1276
        %v1297 = vunpack.c.l.b16 %v1277
        %v1298 = vunpack.c.l.b16 %v1278
        %v1299 = vunpack.c.l.b16 %v1279
        %v1300 = vunpack.c.l.b16 %v1280
        %v1301 = vpack.c.b16 %v1294, %v1293
        %v1302 = vpack.c.b16 %v1296, %v1295
        %v1303 = vpack.c.b16 %v1298, %v1297
        %v1304 = vpack.c.b16 %v1300, %v1299
        %vm1309 = vcmask 523264
        %v1311 = vsel %vm1309, %v1272, 0
        %1313 = vmatpush.bf16.msra.mxu0 0
        %1314 = vmatpush.bf16.msra.mxu0 0
        %1315 = vmatpush.bf16.msra.mxu0 0
        %1316 = vmatpush.bf16.msra.mxu0 0
        %1317 = vmatpush.bf16.msra.mxu0 %v1304
        %1318 = vmatpush.bf16.msra.mxu0 %v1303
        %1319 = vmatpush.bf16.msra.mxu0 %v1302
        %1320 = vmatpush.bf16.msra.mxu0 %v1301
        %1321 = vmatmul.bf16.gmra.mxu0 %v1311
        %v1322 = vpop.f32.mrf.mxu0
        %v1323 = vadd.f32 %v1283, %v1322
        %v1324 = vpop.f32.mrf.mxu0
        %1325 = vdwg.mxu0
        %v1326 = vadd.f32 %v1323, %v1233
        %v1327 = vsel %vm967, %v1326, 0.0
        %1328 = vadd.xlane.f32.xlu0 %v1327
        %v1329 = vpop.xlane.xlu0 %1328
        %v1330 = vmul.f32 %v1329, %v1198
        %v1331 = vsub.f32 %v1326, %v1330
        %v1332 = vmul.f32 %v1331, %v1331
        %v1333 = vsel %vm967, %v1332, 0.0
        %1334 = vadd.xlane.f32.xlu0 %v1333
        %v1335 = vpop.xlane.xlu0 %1334
        %v1336 = vmul.f32 %v1335, %v1198
        %v1337 = vadd.f32 %v1336, 1e-05
        %v1338 = vrsqrt.pop %v1337
        %v1339 = vmul.f32 %v1338, %v1337
        %v1340 = vmul.f32 %v1339, %v1338
        %v1341 = vmul.f32 0.5, %v1340
        %v1342 = vsub.f32 1.5, %v1341
        %v1343 = vmul.f32 %v1338, %v1342
        %vm1344 = vweird.f32 %v1337
        %vm1345 = vweird.f32 %v1338
        %vm1346 = vmor %vm1344, %vm1345
        %v1347 = vsel %vm1346, %v1338, %v1343
        %v1348 = vmul.f32 %v1331, %v1347
        %v1349 = vld [vmem:[%s17] sm:$0x1]
        %v1351 = vperm.slane %v1349, 0
        %v1353 = vmul.f32 %v1348, %v1351
        %v1354 = vld [vmem:[%s18] sm:$0x1]
        %v1356 = vperm.slane %v1354, 0
        %v1358 = vadd.f32 %v1353, %v1356
        %v1359 = vmul.f32 %v1358, %v1231
        %1360 = vst.msk [vmem:[%s838] sm:$0xff] %vm967, %v1359
        %s1361 = sand.u32 %s486, 1
        %s1362 = scalar_lea.sflag [#allocation6], %s1361
        %s1363 = sand.u32 %s486, 1
        %s1364 = smul.addr %s1363, 8
        %s1365 = scalar_lea.vmem [#allocation21], %s1364
        %s1366 = sand.u32 %s514, 1
        %s1367 = scalar_lea.sflag [#allocation23], %s1366
        %s1368 = sand.u32 %s514, 1
        %s1369 = smul.addr %s1368, 8
        %s1370 = scalar_lea.vmem [#allocation22], %s1369
        // Predicated region
        $region141: #{tpu_custom_call.1} parent=95 // pred_check
          %p1371 = pneg %p496
        $region142: #{tpu_custom_call.1} parent=95 // pred_check_branch
          %1373 = sbr.rel (%p1371) target = $region144
        $region143: #{tpu_custom_call.1} parent=95 // pred_region
          %1375 = vsyncadd %s1362, 0
          %s1376 = sadd.s32 %s51, %s50
          %s1377 = smul.addr %s1376, 8
          %s1378 = scalar_lea.hbm %s19, %s1377
          %s1380 = sshll.u32 %s1365, 4
          %s1381 = int_to_ptr.vmem [resolvable:$true] %s1380
          %s1382 = sshll.u32 %s1378, 4
          %s1383 = int_to_ptr.hbm [resolvable:$true] %s1382
          %1385 = dma.vmem_to_hbm [thread:$0]  %s1381, 128, %s1383, %s1362
        $region144: #{tpu_custom_call.1} parent=95 // pred_fallthru
          _
        // Predicated region
        $region145: #{tpu_custom_call.1} parent=95 // pred_check
          %p1386 = pneg %p524
        $region146: #{tpu_custom_call.1} parent=95 // pred_check_branch
          %1388 = sbr.rel (%p1386) target = $region148
        $region147: #{tpu_custom_call.1} parent=95 // pred_region
          %1390 = vsyncadd %s1367, 0
          %s1391 = sadd.s32 %s51, %s50
          %s1392 = smul.addr %s1391, 4
          %s1393 = scalar_lea.hbm %s20, %s1392
          %s1394 = sshll.u32 %s1370, 4
          %s1395 = int_to_ptr.vmem [resolvable:$true] %s1394
          %s1396 = sshll.u32 %s1393, 4
          %s1397 = int_to_ptr.hbm [resolvable:$true] %s1396
          %1402 = dma.vmem_to_hbm [thread:$0]  %s1395, 128, %s1397, %s1367, 64, 128, 4
        $region148: #{tpu_custom_call.1} parent=95 // pred_fallthru
          _
      $region96: #{tpu_custom_call.1} parent=5 // pred_fallthru
        _
      %p1403 = scmp.le.s32.totalorder 2, %s41
      // Predicated region
      $region149: #{tpu_custom_call.1} parent=5 // pred_check
        %p1404 = pneg %p1403
      $region150: #{tpu_custom_call.1} parent=5 // pred_check_branch
        %1406 = sbr.rel (%p1404) target = $region152
      $region151: #{tpu_custom_call.1} parent=5 // pred_region
        %s1407 = ssub.s32 %s41, 2
        // Predicated region
        $region153: #{tpu_custom_call.1} parent=151 // pred_check
          %p1408 = pneg %p502
        $region154: #{tpu_custom_call.1} parent=151 // pred_check_branch
          %1410 = sbr.rel (%p1408) target = $region156
        $region155: #{tpu_custom_call.1} parent=151 // pred_region
          %s1411 = sand.u32 %s487, 1
          %s1412 = scalar_lea.sflag [#allocation6], %s1411
          %s1413 = sand.u32 %s487, 1
          %s1414 = smul.addr %s1413, 8
          %s1415 = scalar_lea.vmem [#allocation21], %s1414
          %1417 = dma.done %s1412, 128
        $region156: #{tpu_custom_call.1} parent=151 // pred_fallthru
          _
        // Predicated region
        $region157: #{tpu_custom_call.1} parent=151 // pred_check
          %p1418 = pneg %p530
        $region158: #{tpu_custom_call.1} parent=151 // pred_check_branch
          %1420 = sbr.rel (%p1418) target = $region160
        $region159: #{tpu_custom_call.1} parent=151 // pred_region
          %s1421 = sand.u32 %s515, 1
          %s1422 = scalar_lea.sflag [#allocation23], %s1421
          %s1423 = sand.u32 %s515, 1
          %s1424 = smul.addr %s1423, 8
          %s1425 = scalar_lea.vmem [#allocation22], %s1424
          %1427 = dma.done %s1422, 128
        $region160: #{tpu_custom_call.1} parent=151 // pred_fallthru
          _
      $region152: #{tpu_custom_call.1} parent=5 // pred_fallthru
        _
    $region6: #{tpu_custom_call.1} parent=1 // loop_footer
      %s45 = sadd.s32 1, %s41
    $region7: #{tpu_custom_call.1} parent=1 // loop_footer_branch
      %40 = sbr.rel target = $region3
    $region8: #{tpu_custom_call.1} parent=1 // loop_exit
      _
    %1428 = vsyncpa [#allocation5], 1
    %s1429 = scalar_lea.sflag [#allocation5], 1
    %1430 = vsyncpa %s1429, 1
    %1431 = vsyncpa [#allocation8], 1
    %1432 = vsyncpa [#allocation11], 1
    %1433 = vsyncpa [#allocation14], 1
    %1434 = vsyncpa [#allocation17], 1
    %1435 = vsyncpa [#allocation20], 1
    %1436 = vsyncpa [#allocation6], 1
    %s1437 = scalar_lea.sflag [#allocation6], 1
    %1438 = vsyncpa %s1437, 1
    %1439 = vsyncpa [#allocation23], 1
    %s1440 = scalar_lea.sflag [#allocation23], 1
    %1441 = vsyncpa %s1440, 1

</llo_original>
